<compile_context>
chip_gen: v7x
topology: tpu7x:2x2x1
jax: 0.10.0
libtpu: 0.0.40
codegen_flags: <defaults>
</compile_context>

<pallas_src>
import functools

import jax
import jax.numpy as jnp
from jax.experimental import pallas as pl
from jax.experimental.pallas import tpu as pltpu


def _round_up(x: int, m: int) -> int:
    return ((x + m - 1) // m) * m


def _cdiv(a: int, b: int) -> int:
    return -(-a // b)


def _sublane_multiple(dtype) -> int:
    """Sublane requirement for the second-to-last block dim by element size."""
    return {4: 8, 2: 16, 1: 32}.get(jnp.dtype(dtype).itemsize, 8)


def _layer1_dtype(matmul_weight_dtype):
    """bf16 layer-1 elementwise math only where the VPU has a bf16 datapath
    (v6e/v7x) and the matmul weights are bf16; f32 otherwise (v5e has no bf16
    VPU/EUP datapath)."""
    if jnp.dtype(matmul_weight_dtype) != jnp.dtype(jnp.bfloat16):
        return jnp.float32
    try:
        kind = jax.devices()[0].device_kind.lower()
    except Exception:
        return jnp.float32
    if ("v6" in kind) or ("v7" in kind):
        return jnp.bfloat16
    return jnp.float32


def _mlp_kernel(x_ref, w1_ref, b1_ref, w2_ref, b2_ref, w3_ref, b3_ref,
                w4_ref, b4_ref, o_ref, *, sigmoid: bool, idim: int,
                narrow_out: bool, l1_dtype):
    f32 = jnp.float32

    # ---- Layer 1: Linear(idim -> hdim) + ReLU.
    # K = idim is tiny (2): a depth-2 MXU matmul fills 2/256 of the systolic
    # array, so use VPU broadcast multiply-adds instead.  Compute dtype is
    # bf16 on v6e/v7x (feeds the bf16 layer-2 matmul directly), f32 on v5e.
    cdt = l1_dtype
    x = x_ref[...].astype(cdt)                        # (TILE_B, idim)
    w1 = w1_ref[...].astype(cdt)                      # (idim, hdim)
    acc = x[:, 0:1] * w1[0:1, :]                      # (TILE_B, hdim)
    for k in range(1, idim):                          # static unroll, idim small
        acc = acc + x[:, k:k + 1] * w1[k:k + 1, :]
    h = jnp.maximum(acc + b1_ref[...].astype(cdt), 0.0)

    # ---- Layers 2 & 3: hdim x hdim MXU matmuls (bf16 operands by default),
    # f32 accumulation; bias adds and ReLU in f32.
    h = jnp.dot(h.astype(w2_ref.dtype), w2_ref[...], preferred_element_type=f32)
    h = jnp.maximum(h + b2_ref[...], 0.0)
    h = jnp.dot(h.astype(w3_ref.dtype), w3_ref[...], preferred_element_type=f32)
    h = jnp.maximum(h + b3_ref[...], 0.0)

    # ---- Layer 4: Linear(hdim -> odim).
    if narrow_out:
        # odim == 1: lane-wise multiply + XLU cross-lane reduce instead of an
        # N=1 MXU matmul.  Bias is an SMEM scalar.
        y = jnp.sum(h * w4_ref[...], axis=-1, keepdims=True) + b4_ref[0]
    else:
        y = jnp.dot(h.astype(w4_ref.dtype), w4_ref[...],
                    preferred_element_type=f32) + b4_ref[...]

    if sigmoid:
        y = jax.nn.sigmoid(y)

    # Narrow (tile, odim) store: the few masked vst.msk per step are far
    # cheaper than the 128x-inflated lane-dense slab writeback it replaces.
    o_ref[...] = y.astype(o_ref.dtype)


def discriminator_forward(x, params, *, sigmoid: bool = False,
                          tile_b: int = 2048, l1_dtype=None):
    """Fused Discriminator MLP forward as a single batched-grid Pallas kernel.

    x: (B, idim); params = (w1, b1, w2, b2, w3, b3, w4, b4) with weights stored
    as (in_features, out_features) so y = x @ W + b (== PyTorch x @ W.T + b).
    w2/w3 may be bf16 (default from init_params); biases should be f32.
    """
    w1, b1, w2, b2, w3, b3, w4, b4 = params
    idim, hdim = w1.shape
    odim = w4.shape[1]
    B = x.shape[0]
    out_dtype = x.dtype

    if l1_dtype is None:
        l1_dtype = _layer1_dtype(w2.dtype)

    # ---- Batch tiling (grid-count aware).
    sub = max(_sublane_multiple(x.dtype), _sublane_multiple(out_dtype))
    if B < 2 * sub:
        steps = 1                                   # tiny batch: single step
    else:
        half = _round_up(_cdiv(B, 2), sub)
        if half <= tile_b:
            steps = 2                               # one step per v7x TC
        else:
            steps = _cdiv(B, tile_b)
            if steps % 2:
                steps += 1                          # keep grid even for v7x
    tile = _round_up(_cdiv(B, steps), sub)
    b_pad = steps * tile
    if b_pad != B:
        x = jnp.pad(x, ((0, b_pad - B), (0, 0)))
    grid = (steps,)

    narrow_out = (odim == 1)
    if narrow_out:
        w4_k = w4.reshape(1, hdim).astype(jnp.float32)   # row for VPU/XLU path
        b4_k = b4.reshape(1).astype(jnp.float32)         # SMEM scalar
        w4_spec = pl.BlockSpec((1, hdim), lambda i: (0, 0))
        b4_spec = pl.BlockSpec(memory_space=pltpu.SMEM)
    else:
        w4_k = w4
        b4_k = b4.reshape(1, odim).astype(jnp.float32)
        w4_spec = pl.BlockSpec((hdim, odim), lambda i: (0, 0))
        b4_spec = pl.BlockSpec((1, odim), lambda i: (0, 0))

    b1_k = b1.reshape(1, hdim).astype(jnp.float32)
    b2_k = b2.reshape(1, hdim).astype(jnp.float32)
    b3_k = b3.reshape(1, hdim).astype(jnp.float32)

    def resident(shape):
        return pl.BlockSpec(shape, lambda i: (0, 0))

    kernel = functools.partial(_mlp_kernel, sigmoid=sigmoid, idim=idim,
                               narrow_out=narrow_out, l1_dtype=l1_dtype)

    nbytes = lambda a: int(a.size) * a.dtype.itemsize
    flops = 2 * b_pad * (idim * hdim + 2 * hdim * hdim + hdim * odim)
    bytes_accessed = (nbytes(x)
                      + sum(nbytes(a) for a in (w1, b1_k, w2, b2_k, w3, b3_k,
                                                w4_k, b4_k))
                      + b_pad * odim * jnp.dtype(out_dtype).itemsize)
    cost = pl.CostEstimate(flops=int(flops),
                           transcendentals=int(b_pad * odim) if sigmoid else 0,
                           bytes_accessed=int(bytes_accessed))

    out = pl.pallas_call(
        kernel,
        out_shape=jax.ShapeDtypeStruct((b_pad, odim), out_dtype),
        grid=grid,
        in_specs=[
            pl.BlockSpec((tile, idim), lambda i: (i, 0)),   # x: pipelined
            resident((idim, hdim)),                         # w1 (resident)
            resident((1, hdim)),                            # b1
            resident((hdim, hdim)),                         # w2
            resident((1, hdim)),                            # b2
            resident((hdim, hdim)),                         # w3
            resident((1, hdim)),                            # b3
            w4_spec,                                        # w4
            b4_spec,                                        # b4 (SMEM scalar)
        ],
        out_specs=pl.BlockSpec((tile, odim), lambda i: (i, 0)),
        compiler_params=pltpu.CompilerParams(
            dimension_semantics=("parallel",),   # v7x: shard batch over 2 TCs
            vmem_limit_bytes=32 * 1024 * 1024,   # explicit, portable budget
        ),
        cost_estimate=cost,
    )(x, w1, b1_k, w2, b2_k, w3, b3_k, w4_k, b4_k)

    return out[:B, :]


def init_params(key, idim=2, hdim=512, odim=1, *, matmul_dtype=jnp.bfloat16):
    """Deterministic synthetic parameter init (PyTorch-Linear-style bounds).

    The two hdim x hdim weights default to bf16 storage (MXU-native on
    v5e/v6e/v7x); first/last layers and all biases stay f32.
    """
    ks = jax.random.split(key, 8)

    def lin(kw, kb, fan_in, fan_out, w_dtype):
        bound = 1.0 / float(fan_in) ** 0.5
        w = jax.random.uniform(kw, (fan_in, fan_out), jnp.float32,
                               -bound, bound).astype(w_dtype)
        b = jax.random.uniform(kb, (1, fan_out), jnp.float32, -bound, bound)
        return w, b

    w1, b1 = lin(ks[0], ks[1], idim, hdim, jnp.float32)
    w2, b2 = lin(ks[2], ks[3], hdim, hdim, matmul_dtype)
    w3, b3 = lin(ks[4], ks[5], hdim, hdim, matmul_dtype)
    w4, b4 = lin(ks[6], ks[7], hdim, odim, jnp.float32)
    return (w1, b1, w2, b2, w3, b3, w4, b4)


def _reference_forward(x, params, *, sigmoid=False, l1_dtype=None):
    """Pure-JAX reference mirroring the kernel's dtype handling."""
    w1, b1, w2, b2, w3, b3, w4, b4 = params
    f32 = jnp.float32
    if l1_dtype is None:
        l1_dtype = _layer1_dtype(w2.dtype)
    h = jnp.maximum(x.astype(l1_dtype) @ w1.astype(l1_dtype)
                    + b1.reshape(1, -1).astype(l1_dtype), 0.0)
    h = jnp.maximum(jnp.dot(h.astype(w2.dtype), w2,
                            preferred_element_type=f32)
                    + b2.reshape(1, -1).astype(f32), 0.0)
    h = jnp.maximum(jnp.dot(h.astype(w3.dtype), w3,
                            preferred_element_type=f32)
                    + b3.reshape(1, -1).astype(f32), 0.0)
    y = (jnp.dot(h, w4.astype(f32), preferred_element_type=f32)
         + b4.reshape(1, -1).astype(f32))
    if sigmoid:
        y = jax.nn.sigmoid(y)
    return y.astype(x.dtype)


if __name__ == "__main__":
    key = jax.random.PRNGKey(0)
    k_x, k_p = jax.random.split(key)

    # Module defaults: idim=2, hdim=512, odim=1.  Small batch; tiling picks a
    # 2-step grid (tile=32) so the "parallel" batch axis exercises both cores.
    B, idim, hdim, odim = 64, 2, 512, 1
    x = jax.random.normal(k_x, (B, idim), jnp.float32)

    # Default parameter set: hdim x hdim weights stored bf16.
    params = init_params(k_p, idim=idim, hdim=hdim, odim=odim)

    out = jax.block_until_ready(discriminator_forward(x, params, sigmoid=False))
    ref = _reference_forward(x, params, sigmoid=False)
    assert out.shape == (B, odim), out.shape
    assert jnp.allclose(out, ref, atol=2e-2, rtol=5e-2), "bf16 path mismatch"

    # Sigmoid path (module option).
    out_s = jax.block_until_ready(discriminator_forward(x, params, sigmoid=True))
    ref_s = _reference_forward(x, params, sigmoid=True)
    assert jnp.allclose(out_s, ref_s, atol=2e-2, rtol=5e-2), "sigmoid mismatch"

    # Pure-f32 parameters with a non-multiple-of-tile batch (exercises batch
    # padding and the f32 MXU / f32 layer-1 path).
    params_f32 = init_params(k_p, idim=idim, hdim=hdim, odim=odim,
                             matmul_dtype=jnp.float32)
    x2 = jax.random.normal(k_x, (50, idim), jnp.float32)
    out_f = jax.block_until_ready(discriminator_forward(x2, params_f32))
    ref_f = _reference_forward(x2, params_f32)
    assert out_f.shape == (50, odim), out_f.shape
    assert jnp.allclose(out_f, ref_f, atol=5e-4, rtol=5e-4), "f32 path mismatch"

    print("KERNEL_OK")
</pallas_src>

<mosaic_0001>
module attributes {stable_mosaic.version = 11 : i64} {
  func.func @_mlp_kernel(%arg0: i32, %arg1: memref<32x2xf32, #tpu.memory_space<vmem>>, %arg2: memref<2x512xf32, #tpu.memory_space<vmem>>, %arg3: memref<1x512xf32, #tpu.memory_space<vmem>>, %arg4: memref<512x512xbf16, #tpu.memory_space<vmem>>, %arg5: memref<1x512xf32, #tpu.memory_space<vmem>>, %arg6: memref<512x512xbf16, #tpu.memory_space<vmem>>, %arg7: memref<1x512xf32, #tpu.memory_space<vmem>>, %arg8: memref<1x512xf32, #tpu.memory_space<vmem>>, %arg9: memref<1xf32, #tpu.memory_space<smem>>, %arg10: memref<32x1xf32, #tpu.memory_space<vmem>>) attributes {dimension_semantics = [#tpu.dimension_semantics<parallel>], iteration_bounds = array<i64: 2>, scalar_prefetch = 0 : i64, scratch_operands = 0 : i64, tpu.core_type = #tpu.core_type<tc>, window_params = [{transform_indices = @transform_0, window_bounds = array<i64: 32, 2>}, {pipeline_mode = #tpu.pipeline_mode<synchronous>, transform_indices = @transform_1, window_bounds = array<i64: 2, 512>}, {pipeline_mode = #tpu.pipeline_mode<synchronous>, transform_indices = @transform_2, window_bounds = array<i64: 1, 512>}, {pipeline_mode = #tpu.pipeline_mode<synchronous>, transform_indices = @transform_3, window_bounds = array<i64: 512, 512>}, {pipeline_mode = #tpu.pipeline_mode<synchronous>, transform_indices = @transform_4, window_bounds = array<i64: 1, 512>}, {pipeline_mode = #tpu.pipeline_mode<synchronous>, transform_indices = @transform_5, window_bounds = array<i64: 512, 512>}, {pipeline_mode = #tpu.pipeline_mode<synchronous>, transform_indices = @transform_6, window_bounds = array<i64: 1, 512>}, {pipeline_mode = #tpu.pipeline_mode<synchronous>, transform_indices = @transform_7, window_bounds = array<i64: 1, 512>}, {transform_indices = @transform_8, window_bounds = array<i64: 1>}, {transform_indices = @transform_9, window_bounds = array<i64: 32, 1>}]} {
    %c0 = arith.constant 0 : index
    %c0_0 = arith.constant 0 : index
    %0 = vector.load %arg1[%c0, %c0_0] : memref<32x2xf32, #tpu.memory_space<vmem>>, vector<32x2xf32>
    %c0_1 = arith.constant 0 : index
    %c0_2 = arith.constant 0 : index
    %1 = vector.load %arg2[%c0_1, %c0_2] : memref<2x512xf32, #tpu.memory_space<vmem>>, vector<2x512xf32>
    %2 = vector.extract_strided_slice %0 {offsets = [0, 0], sizes = [32, 1], strides = [1, 1]} : vector<32x2xf32> to vector<32x1xf32>
    %3 = vector.extract_strided_slice %1 {offsets = [0, 0], sizes = [1, 512], strides = [1, 1]} : vector<2x512xf32> to vector<1x512xf32>
    %4 = vector.broadcast %2 : vector<32x1xf32> to vector<32x512xf32>
    %5 = vector.broadcast %3 : vector<1x512xf32> to vector<32x512xf32>
    %6 = arith.mulf %4, %5 : vector<32x512xf32>
    %7 = vector.extract_strided_slice %0 {offsets = [0, 1], sizes = [32, 1], strides = [1, 1]} : vector<32x2xf32> to vector<32x1xf32>
    %8 = vector.extract_strided_slice %1 {offsets = [1, 0], sizes = [1, 512], strides = [1, 1]} : vector<2x512xf32> to vector<1x512xf32>
    %9 = vector.broadcast %7 : vector<32x1xf32> to vector<32x512xf32>
    %10 = vector.broadcast %8 : vector<1x512xf32> to vector<32x512xf32>
    %11 = arith.mulf %9, %10 : vector<32x512xf32>
    %12 = arith.addf %6, %11 : vector<32x512xf32>
    %c0_3 = arith.constant 0 : index
    %c0_4 = arith.constant 0 : index
    %13 = vector.load %arg3[%c0_3, %c0_4] : memref<1x512xf32, #tpu.memory_space<vmem>>, vector<1x512xf32>
    %14 = vector.broadcast %13 : vector<1x512xf32> to vector<32x512xf32>
    %15 = arith.addf %12, %14 : vector<32x512xf32>
    %cst = arith.constant 0.000000e+00 : f32
    %16 = vector.broadcast %cst : f32 to vector<32x512xf32>
    %17 = arith.maximumf %15, %16 : vector<32x512xf32>
    %18 = arith.truncf %17 : vector<32x512xf32> to vector<32x512xbf16>
    %c0_5 = arith.constant 0 : index
    %c0_6 = arith.constant 0 : index
    %19 = vector.load %arg4[%c0_5, %c0_6] : memref<512x512xbf16, #tpu.memory_space<vmem>>, vector<512x512xbf16>
    %cst_7 = arith.constant dense<0.000000e+00> : vector<32x512xf32>
    %20 = tpu.matmul %18, %19, %cst_7 {dimension_numbers = #tpu.dot_dimension_numbers<[1], [0], [0], [1], [0, 0, 1, 1], [], []>} : vector<32x512xbf16>, vector<512x512xbf16>, vector<32x512xf32> -> vector<32x512xf32>
    %c0_8 = arith.constant 0 : index
    %c0_9 = arith.constant 0 : index
    %21 = vector.load %arg5[%c0_8, %c0_9] : memref<1x512xf32, #tpu.memory_space<vmem>>, vector<1x512xf32>
    %22 = vector.broadcast %21 : vector<1x512xf32> to vector<32x512xf32>
    %23 = arith.addf %20, %22 : vector<32x512xf32>
    %cst_10 = arith.constant 0.000000e+00 : f32
    %24 = vector.broadcast %cst_10 : f32 to vector<32x512xf32>
    %25 = arith.maximumf %23, %24 : vector<32x512xf32>
    %26 = arith.truncf %25 : vector<32x512xf32> to vector<32x512xbf16>
    %c0_11 = arith.constant 0 : index
    %c0_12 = arith.constant 0 : index
    %27 = vector.load %arg6[%c0_11, %c0_12] : memref<512x512xbf16, #tpu.memory_space<vmem>>, vector<512x512xbf16>
    %cst_13 = arith.constant dense<0.000000e+00> : vector<32x512xf32>
    %28 = tpu.matmul %26, %27, %cst_13 {dimension_numbers = #tpu.dot_dimension_numbers<[1], [0], [0], [1], [0, 0, 1, 1], [], []>} : vector<32x512xbf16>, vector<512x512xbf16>, vector<32x512xf32> -> vector<32x512xf32>
    %c0_14 = arith.constant 0 : index
    %c0_15 = arith.constant 0 : index
    %29 = vector.load %arg7[%c0_14, %c0_15] : memref<1x512xf32, #tpu.memory_space<vmem>>, vector<1x512xf32>
    %30 = vector.broadcast %29 : vector<1x512xf32> to vector<32x512xf32>
    %31 = arith.addf %28, %30 : vector<32x512xf32>
    %cst_16 = arith.constant 0.000000e+00 : f32
    %32 = vector.broadcast %cst_16 : f32 to vector<32x512xf32>
    %33 = arith.maximumf %31, %32 : vector<32x512xf32>
    %c0_17 = arith.constant 0 : index
    %c0_18 = arith.constant 0 : index
    %34 = vector.load %arg8[%c0_17, %c0_18] : memref<1x512xf32, #tpu.memory_space<vmem>>, vector<1x512xf32>
    %35 = vector.broadcast %34 : vector<1x512xf32> to vector<32x512xf32>
    %36 = arith.mulf %33, %35 : vector<32x512xf32>
    %cst_19 = arith.constant dense<0.000000e+00> : vector<32xf32>
    %37 = vector.multi_reduction <add>, %36, %cst_19 [1] : vector<32x512xf32> to vector<32xf32>
    %38 = vector.shape_cast %37 : vector<32xf32> to vector<32x1xf32>
    %c0_20 = arith.constant 0 : index
    %39 = memref.load %arg9[%c0_20] : memref<1xf32, #tpu.memory_space<smem>>
    %40 = vector.broadcast %39 : f32 to vector<32x1xf32>
    %41 = arith.addf %38, %40 : vector<32x1xf32>
    %c0_21 = arith.constant 0 : index
    %c0_22 = arith.constant 0 : index
    %42 = vector.load %arg10[%c0_21, %c0_22] : memref<32x1xf32, #tpu.memory_space<vmem>>, vector<32x1xf32>
    tpu.vector_store %arg10[%c0_21, %c0_22], %41 {strides = array<i32>} : memref<32x1xf32, #tpu.memory_space<vmem>>, vector<32x1xf32>,
    return
  }
  func.func @transform_0(%arg0: i32) -> (i32, i32) {
    %c0_i32 = arith.constant 0 : i32
    %c0_i32_0 = arith.constant 0 : i32
    return %arg0, %c0_i32 : i32, i32
  }
  func.func @transform_1(%arg0: i32) -> (i32, i32) {
    %c0_i32 = arith.constant 0 : i32
    %c0_i32_0 = arith.constant 0 : i32
    %c0_i32_1 = arith.constant 0 : i32
    return %c0_i32, %c0_i32_0 : i32, i32
  }
  func.func @transform_2(%arg0: i32) -> (i32, i32) {
    %c0_i32 = arith.constant 0 : i32
    %c0_i32_0 = arith.constant 0 : i32
    %c0_i32_1 = arith.constant 0 : i32
    return %c0_i32, %c0_i32_0 : i32, i32
  }
  func.func @transform_3(%arg0: i32) -> (i32, i32) {
    %c0_i32 = arith.constant 0 : i32
    %c0_i32_0 = arith.constant 0 : i32
    %c0_i32_1 = arith.constant 0 : i32
    return %c0_i32, %c0_i32_0 : i32, i32
  }
  func.func @transform_4(%arg0: i32) -> (i32, i32) {
    %c0_i32 = arith.constant 0 : i32
    %c0_i32_0 = arith.constant 0 : i32
    %c0_i32_1 = arith.constant 0 : i32
    return %c0_i32, %c0_i32_0 : i32, i32
  }
  func.func @transform_5(%arg0: i32) -> (i32, i32) {
    %c0_i32 = arith.constant 0 : i32
    %c0_i32_0 = arith.constant 0 : i32
    %c0_i32_1 = arith.constant 0 : i32
    return %c0_i32, %c0_i32_0 : i32, i32
  }
  func.func @transform_6(%arg0: i32) -> (i32, i32) {
    %c0_i32 = arith.constant 0 : i32
    %c0_i32_0 = arith.constant 0 : i32
    %c0_i32_1 = arith.constant 0 : i32
    return %c0_i32, %c0_i32_0 : i32, i32
  }
  func.func @transform_7(%arg0: i32) -> (i32, i32) {
    %c0_i32 = arith.constant 0 : i32
    %c0_i32_0 = arith.constant 0 : i32
    %c0_i32_1 = arith.constant 0 : i32
    return %c0_i32, %c0_i32_0 : i32, i32
  }
  func.func @transform_8(%arg0: i32) -> i32 {
    %c0_i32 = arith.constant 0 : i32
    %c0_i32_0 = arith.constant 0 : i32
    return %c0_i32 : i32
  }
  func.func @transform_9(%arg0: i32) -> (i32, i32) {
    %c0_i32 = arith.constant 0 : i32
    %c0_i32_0 = arith.constant 0 : i32
    return %arg0, %c0_i32 : i32, i32
  }
}

</mosaic_0001>

<llo_original>
// kernel: tpu_custom_call.1
$region0: #{tpu_custom_call.1}
  #allocation0 [shape = 'u32[]', space=smem, size = 0x4, offset = 0x4, fixed_abs, tag = 'smem constant byte address 0x4 - core index']
  #allocation1 [shape = 'u32[144,128]{1,0:T(1,128)}', space=vmem, size = 0x12000, scoped, tag = 'internal scratch']
  #allocation2 [shape = 'f32[1]{0:T(128)S(6)}', space=smem, size = 0x200, scoped, tag = 'scoped memory for tpu_custom_call.1']
  %s0 = inlined_call_operand.vmem [shape: f32[64,2], index: 0, kind: input, shape index: {}]
  %s1 = inlined_call_operand.vmem [shape: f32[2,512], index: 1, kind: input, shape index: {}]
  %s2 = inlined_call_operand.vmem [shape: f32[1,512], index: 2, kind: input, shape index: {}]
  %s3 = inlined_call_operand.hbm [shape: bf16[512,512], index: 3, kind: input, shape index: {}]
  %s4 = inlined_call_operand.vmem [shape: f32[1,512], index: 4, kind: input, shape index: {}]
  %s5 = inlined_call_operand.hbm [shape: bf16[512,512], index: 5, kind: input, shape index: {}]
  %s6 = inlined_call_operand.vmem [shape: f32[1,512], index: 6, kind: input, shape index: {}]
  %s7 = inlined_call_operand.vmem [shape: f32[1,512], index: 7, kind: input, shape index: {}]
  %s8 = inlined_call_operand.<no memory space> [shape: f32[1], index: 8, kind: input, shape index: {}]
  %s9 = inlined_call_operand.vmem [shape: f32[64,1], index: 9, kind: output, shape index: {}]
  %s10 = sld [smem:[#allocation0]]
  $region77: #{tpu_custom_call.1} parent=0
    _
  %s12 = ssub.s32 1, %s10
  %s13 = scalar_select 0, %s12, %s10
  %14 = sst [smem:[#allocation2]] %s8
  $region1: #{tpu_custom_call.1} parent=0
    #allocation3 [shape = 'u8[524288]{0}', space=vmem, size = 0x80000, scoped, tag = 'input window, operand 3, single buffered']
    #allocation4 [shape = 's32[2]{0}', space=sflag, size = 0x8, scoped, tag = 'scoped memory for tpu_custom_call.1']
    #allocation5 [shape = 'u8[524288]{0}', space=vmem, size = 0x80000, scoped, tag = 'input window, operand 5, single buffered']
    #allocation6 [shape = 's32[1]{0}', space=sflag, size = 0x4, scoped, tag = 'scoped memory for tpu_custom_call.1']
    %15 = vsyncpa [#allocation4], 0
    %16 = vsyncpa [#allocation6], 0
    loop: start=0, step=1, limit=4
    $region2: #{tpu_custom_call.1} parent=1 // loop_pre_header
      _
    $region3: #{tpu_custom_call.1} parent=1 // loop_header
      %s18 = sphi 0, %s22
      %p19 = scmp.ge.s32.totalorder %s18, 4
      %s28 = sphi 0, %s30
      %s31 = sphi 0, %s28
      %s32 = sphi 0, %s31
      %s48 = sphi 0, %s32
      %s52 = sphi 0, %s52
      %s54 = sphi 0, %s52
      %s55 = sphi 0, %s54
      %s69 = sphi 0, %s55
      %s73 = sphi 0, %s73
      %s75 = sphi 0, %s73
      %s76 = sphi 0, %s75
      %s90 = sphi 0, %s76
      %s94 = sphi 0, %s94
      %s96 = sphi 0, %s94
      %s97 = sphi 0, %s96
      %s111 = sphi 0, %s97
      %s115 = sphi 0, %s115
      %s117 = sphi 0, %s115
      %s118 = sphi 0, %s117
      %s132 = sphi 0, %s118
      %s136 = sphi 0, %s136
      %s138 = sphi 0, %s136
      %s139 = sphi 0, %s138
      %s153 = sphi 0, %s139
      %s157 = sphi 0, %s157
      %s159 = sphi 0, %s157
      %s160 = sphi 0, %s159
      %s174 = sphi 0, %s160
      %s178 = sphi 0, %s178
      %s180 = sphi 0, %s178
      %s181 = sphi 0, %s180
      %s195 = sphi 0, %s181
      %s199 = sphi 0, %s199
      %s201 = sphi 0, %s199
      %s202 = sphi 0, %s201
      %s216 = sphi 0, %s202
      %s222 = sphi 0, %s224
      %s225 = sphi 0, %s222
      %s226 = sphi 0, %s225
      %s242 = sphi 0, %s226
    $region4: #{tpu_custom_call.1} parent=1 // loop_header_branch
      %21 = sbr.rel (%p19) target = $region8
    $region5: #{tpu_custom_call.1} parent=1 // loop_body
      %s23 = ssub.s32 %s18, 1
      %s24 = ssub.s32 %s18, 2
      %s25 = sadd.s32 %s18, 1
      %s26 = ssub.s32 %s18, %s25
      %p27 = scmp.eq.s32.totalorder %s26, 0
      %s29 = sadd.s32 %s28, 1
      %s30 = scalar_select %p27, %s28, %s29
      %p33 = pneg %p27
      %p34 = scmp.eq.s32.totalorder %s18, 1
      %p35 = por %p33, %p34
      %p36 = scmp.ne.s32.totalorder %s28, %s31
      %p37 = scmp.eq.s32.totalorder %s18, 0
      %p38 = por %p36, %p37
      %p39 = scmp.ne.s32.totalorder %s28, %s31
      %p40 = scmp.eq.s32.totalorder %s23, 1
      %p41 = por %p39, %p40
      %p42 = scmp.ne.s32.totalorder %s31, %s32
      %p43 = scmp.eq.s32.totalorder %s23, 0
      %p44 = por %p42, %p43
      %p45 = scmp.ne.s32.totalorder %s31, %s32
      %p46 = scmp.eq.s32.totalorder %s24, 1
      %p47 = por %p45, %p46
      %p49 = scmp.ne.s32.totalorder %s32, %s48
      %p50 = scmp.eq.s32.totalorder %s24, 0
      %p51 = por %p49, %p50
      %s53 = sadd.s32 %s52, 1
      %p56 = scmp.eq.s32.totalorder %s18, 1
      %p57 = scmp.ne.s32.totalorder %s52, %s54
      %p58 = scmp.eq.s32.totalorder %s18, 0
      %p59 = por %p57, %p58
      %p60 = scmp.ne.s32.totalorder %s52, %s54
      %p61 = scmp.eq.s32.totalorder %s23, 1
      %p62 = por %p60, %p61
      %p63 = scmp.ne.s32.totalorder %s54, %s55
      %p64 = scmp.eq.s32.totalorder %s23, 0
      %p65 = por %p63, %p64
      %p66 = scmp.ne.s32.totalorder %s54, %s55
      %p67 = scmp.eq.s32.totalorder %s24, 1
      %p68 = por %p66, %p67
      %p70 = scmp.ne.s32.totalorder %s55, %s69
      %p71 = scmp.eq.s32.totalorder %s24, 0
      %p72 = por %p70, %p71
      %s74 = sadd.s32 %s73, 1
      %p77 = scmp.eq.s32.totalorder %s18, 1
      %p78 = scmp.ne.s32.totalorder %s73, %s75
      %p79 = scmp.eq.s32.totalorder %s18, 0
      %p80 = por %p78, %p79
      %p81 = scmp.ne.s32.totalorder %s73, %s75
      %p82 = scmp.eq.s32.totalorder %s23, 1
      %p83 = por %p81, %p82
      %p84 = scmp.ne.s32.totalorder %s75, %s76
      %p85 = scmp.eq.s32.totalorder %s23, 0
      %p86 = por %p84, %p85
      %p87 = scmp.ne.s32.totalorder %s75, %s76
      %p88 = scmp.eq.s32.totalorder %s24, 1
      %p89 = por %p87, %p88
      %p91 = scmp.ne.s32.totalorder %s76, %s90
      %p92 = scmp.eq.s32.totalorder %s24, 0
      %p93 = por %p91, %p92
      %s95 = sadd.s32 %s94, 1
      %p98 = scmp.eq.s32.totalorder %s18, 1
      %p99 = scmp.ne.s32.totalorder %s94, %s96
      %p100 = scmp.eq.s32.totalorder %s18, 0
      %p101 = por %p99, %p100
      %p102 = scmp.ne.s32.totalorder %s94, %s96
      %p103 = scmp.eq.s32.totalorder %s23, 1
      %p104 = por %p102, %p103
      %p105 = scmp.ne.s32.totalorder %s96, %s97
      %p106 = scmp.eq.s32.totalorder %s23, 0
      %p107 = por %p105, %p106
      %p108 = scmp.ne.s32.totalorder %s96, %s97
      %p109 = scmp.eq.s32.totalorder %s24, 1
      %p110 = por %p108, %p109
      %p112 = scmp.ne.s32.totalorder %s97, %s111
      %p113 = scmp.eq.s32.totalorder %s24, 0
      %p114 = por %p112, %p113
      %s116 = sadd.s32 %s115, 1
      %p119 = scmp.eq.s32.totalorder %s18, 1
      %p120 = scmp.ne.s32.totalorder %s115, %s117
      %p121 = scmp.eq.s32.totalorder %s18, 0
      %p122 = por %p120, %p121
      %p123 = scmp.ne.s32.totalorder %s115, %s117
      %p124 = scmp.eq.s32.totalorder %s23, 1
      %p125 = por %p123, %p124
      %p126 = scmp.ne.s32.totalorder %s117, %s118
      %p127 = scmp.eq.s32.totalorder %s23, 0
      %p128 = por %p126, %p127
      %p129 = scmp.ne.s32.totalorder %s117, %s118
      %p130 = scmp.eq.s32.totalorder %s24, 1
      %p131 = por %p129, %p130
      %p133 = scmp.ne.s32.totalorder %s118, %s132
      %p134 = scmp.eq.s32.totalorder %s24, 0
      %p135 = por %p133, %p134
      %s137 = sadd.s32 %s136, 1
      %p140 = scmp.eq.s32.totalorder %s18, 1
      %p141 = scmp.ne.s32.totalorder %s136, %s138
      %p142 = scmp.eq.s32.totalorder %s18, 0
      %p143 = por %p141, %p142
      %p144 = scmp.ne.s32.totalorder %s136, %s138
      %p145 = scmp.eq.s32.totalorder %s23, 1
      %p146 = por %p144, %p145
      %p147 = scmp.ne.s32.totalorder %s138, %s139
      %p148 = scmp.eq.s32.totalorder %s23, 0
      %p149 = por %p147, %p148
      %p150 = scmp.ne.s32.totalorder %s138, %s139
      %p151 = scmp.eq.s32.totalorder %s24, 1
      %p152 = por %p150, %p151
      %p154 = scmp.ne.s32.totalorder %s139, %s153
      %p155 = scmp.eq.s32.totalorder %s24, 0
      %p156 = por %p154, %p155
      %s158 = sadd.s32 %s157, 1
      %p161 = scmp.eq.s32.totalorder %s18, 1
      %p162 = scmp.ne.s32.totalorder %s157, %s159
      %p163 = scmp.eq.s32.totalorder %s18, 0
      %p164 = por %p162, %p163
      %p165 = scmp.ne.s32.totalorder %s157, %s159
      %p166 = scmp.eq.s32.totalorder %s23, 1
      %p167 = por %p165, %p166
      %p168 = scmp.ne.s32.totalorder %s159, %s160
      %p169 = scmp.eq.s32.totalorder %s23, 0
      %p170 = por %p168, %p169
      %p171 = scmp.ne.s32.totalorder %s159, %s160
      %p172 = scmp.eq.s32.totalorder %s24, 1
      %p173 = por %p171, %p172
      %p175 = scmp.ne.s32.totalorder %s160, %s174
      %p176 = scmp.eq.s32.totalorder %s24, 0
      %p177 = por %p175, %p176
      %s179 = sadd.s32 %s178, 1
      %p182 = scmp.eq.s32.totalorder %s18, 1
      %p183 = scmp.ne.s32.totalorder %s178, %s180
      %p184 = scmp.eq.s32.totalorder %s18, 0
      %p185 = por %p183, %p184
      %p186 = scmp.ne.s32.totalorder %s178, %s180
      %p187 = scmp.eq.s32.totalorder %s23, 1
      %p188 = por %p186, %p187
      %p189 = scmp.ne.s32.totalorder %s180, %s181
      %p190 = scmp.eq.s32.totalorder %s23, 0
      %p191 = por %p189, %p190
      %p192 = scmp.ne.s32.totalorder %s180, %s181
      %p193 = scmp.eq.s32.totalorder %s24, 1
      %p194 = por %p192, %p193
      %p196 = scmp.ne.s32.totalorder %s181, %s195
      %p197 = scmp.eq.s32.totalorder %s24, 0
      %p198 = por %p196, %p197
      %s200 = sadd.s32 %s199, 1
      %p203 = scmp.eq.s32.totalorder %s18, 1
      %p204 = scmp.ne.s32.totalorder %s199, %s201
      %p205 = scmp.eq.s32.totalorder %s18, 0
      %p206 = por %p204, %p205
      %p207 = scmp.ne.s32.totalorder %s199, %s201
      %p208 = scmp.eq.s32.totalorder %s23, 1
      %p209 = por %p207, %p208
      %p210 = scmp.ne.s32.totalorder %s201, %s202
      %p211 = scmp.eq.s32.totalorder %s23, 0
      %p212 = por %p210, %p211
      %p213 = scmp.ne.s32.totalorder %s201, %s202
      %p214 = scmp.eq.s32.totalorder %s24, 1
      %p215 = por %p213, %p214
      %p217 = scmp.ne.s32.totalorder %s202, %s216
      %p218 = scmp.eq.s32.totalorder %s24, 0
      %p219 = por %p217, %p218
      %s220 = ssub.s32 %s18, %s25
      %p221 = scmp.eq.s32.totalorder %s220, 0
      %s223 = sadd.s32 %s222, 1
      %s224 = scalar_select %p221, %s222, %s223
      %p227 = pneg %p221
      %p228 = scmp.eq.s32.totalorder %s18, 1
      %p229 = por %p227, %p228
      %p230 = scmp.ne.s32.totalorder %s222, %s225
      %p231 = scmp.eq.s32.totalorder %s18, 0
      %p232 = por %p230, %p231
      %p233 = scmp.ne.s32.totalorder %s222, %s225
      %p234 = scmp.eq.s32.totalorder %s23, 1
      %p235 = por %p233, %p234
      %p236 = scmp.ne.s32.totalorder %s225, %s226
      %p237 = scmp.eq.s32.totalorder %s23, 0
      %p238 = por %p236, %p237
      %p239 = scmp.ne.s32.totalorder %s225, %s226
      %p240 = scmp.eq.s32.totalorder %s24, 1
      %p241 = por %p239, %p240
      %p243 = scmp.ne.s32.totalorder %s226, %s242
      %p244 = scmp.eq.s32.totalorder %s24, 0
      %p245 = por %p243, %p244
      %p246 = scmp.le.s32.totalorder 1, %s18
      %p247 = scmp.lt.s32.totalorder %s18, 3
      %p248 = pnand %p246, %p247
      %p249 = pneg %p248
      // Predicated region
      $region9: #{tpu_custom_call.1} parent=5 // pred_check
        _
      $region10: #{tpu_custom_call.1} parent=5 // pred_check_branch
        %251 = sbr.rel (%p248) target = $region12
      $region11: #{tpu_custom_call.1} parent=5 // pred_region
        %s252 = ssub.s32 %s18, 1
        // Predicated region
        $region13: #{tpu_custom_call.1} parent=11 // pred_check
          %p253 = pneg %p65
        $region14: #{tpu_custom_call.1} parent=11 // pred_check_branch
          %255 = sbr.rel (%p253) target = $region16
        $region15: #{tpu_custom_call.1} parent=11 // pred_region
          _
        $region16: #{tpu_custom_call.1} parent=11 // pred_fallthru
          _
        // Predicated region
        $region17: #{tpu_custom_call.1} parent=11 // pred_check
          %p256 = pneg %p86
        $region18: #{tpu_custom_call.1} parent=11 // pred_check_branch
          %258 = sbr.rel (%p256) target = $region20
        $region19: #{tpu_custom_call.1} parent=11 // pred_region
          _
        $region20: #{tpu_custom_call.1} parent=11 // pred_fallthru
          _
        // Predicated region
        $region21: #{tpu_custom_call.1} parent=11 // pred_check
          %p259 = pneg %p107
        $region22: #{tpu_custom_call.1} parent=11 // pred_check_branch
          %261 = sbr.rel (%p259) target = $region24
        $region23: #{tpu_custom_call.1} parent=11 // pred_region
          %s263 = ssub.s32 16384, 16384
          %264 = vsyncadd [#allocation4], %s263
          %s265 = sshll.u32 [#allocation3], 4
          %s266 = int_to_ptr.vmem [resolvable:$true] %s265
          %271 = dma.hbm_to_vmem [thread:$0]  %s3, 16384, %s266, [#allocation4], 256, 256, 16
        $region24: #{tpu_custom_call.1} parent=11 // pred_fallthru
          _
        // Predicated region
        $region25: #{tpu_custom_call.1} parent=11 // pred_check
          %p272 = pneg %p128
        $region26: #{tpu_custom_call.1} parent=11 // pred_check_branch
          %274 = sbr.rel (%p272) target = $region28
        $region27: #{tpu_custom_call.1} parent=11 // pred_region
          _
        $region28: #{tpu_custom_call.1} parent=11 // pred_fallthru
          _
        // Predicated region
        $region29: #{tpu_custom_call.1} parent=11 // pred_check
          %p275 = pneg %p149
        $region30: #{tpu_custom_call.1} parent=11 // pred_check_branch
          %277 = sbr.rel (%p275) target = $region32
        $region31: #{tpu_custom_call.1} parent=11 // pred_region
          %s279 = ssub.s32 16384, 16384
          %280 = vsyncadd [#allocation6], %s279
          %s281 = sshll.u32 [#allocation5], 4
          %s282 = int_to_ptr.vmem [resolvable:$true] %s281
          %287 = dma.hbm_to_vmem [thread:$0]  %s5, 16384, %s282, [#allocation6], 256, 256, 16
        $region32: #{tpu_custom_call.1} parent=11 // pred_fallthru
          _
        // Predicated region
        $region33: #{tpu_custom_call.1} parent=11 // pred_check
          %p288 = pneg %p170
        $region34: #{tpu_custom_call.1} parent=11 // pred_check_branch
          %290 = sbr.rel (%p288) target = $region36
        $region35: #{tpu_custom_call.1} parent=11 // pred_region
          _
        $region36: #{tpu_custom_call.1} parent=11 // pred_fallthru
          _
        // Predicated region
        $region37: #{tpu_custom_call.1} parent=11 // pred_check
          %p291 = pneg %p191
        $region38: #{tpu_custom_call.1} parent=11 // pred_check_branch
          %293 = sbr.rel (%p291) target = $region40
        $region39: #{tpu_custom_call.1} parent=11 // pred_region
          _
        $region40: #{tpu_custom_call.1} parent=11 // pred_fallthru
          _
        // Predicated region
        $region41: #{tpu_custom_call.1} parent=11 // pred_check
          %p294 = pneg %p212
        $region42: #{tpu_custom_call.1} parent=11 // pred_check_branch
          %296 = sbr.rel (%p294) target = $region44
        $region43: #{tpu_custom_call.1} parent=11 // pred_region
          _
        $region44: #{tpu_custom_call.1} parent=11 // pred_fallthru
          _
      $region12: #{tpu_custom_call.1} parent=5 // pred_fallthru
        _
      %p297 = scmp.lt.s32.totalorder %s18, 2
      // Predicated region
      $region45: #{tpu_custom_call.1} parent=5 // pred_check
        %p298 = pneg %p297
      $region46: #{tpu_custom_call.1} parent=5 // pred_check_branch
        %300 = sbr.rel (%p298) target = $region48
      $region47: #{tpu_custom_call.1} parent=5 // pred_region
        // Predicated region
        $region49: #{tpu_custom_call.1} parent=47 // pred_check
          %p301 = pneg %p38
        $region50: #{tpu_custom_call.1} parent=47 // pred_check_branch
          %303 = sbr.rel (%p301) target = $region52
        $region51: #{tpu_custom_call.1} parent=47 // pred_region
          %s304 = smul.u32 4, %s18
          %p305 = scmp.lt.s32.totalorder %s304, 7
          %s306 = scalar_select %p305, %s304, 7
          %s307 = smul.addr %s306, 8
          %s308 = scalar_lea.vmem %s0, %s307
          %s309 = smul.u32 4, %s18
        $region52: #{tpu_custom_call.1} parent=47 // pred_fallthru
          _
      $region48: #{tpu_custom_call.1} parent=5 // pred_fallthru
        _
      %p310 = scmp.le.s32.totalorder 1, %s18
      %p311 = scmp.lt.s32.totalorder %s18, 3
      %p312 = pnand %p310, %p311
      %p313 = pneg %p312
      // Predicated region
      $region53: #{tpu_custom_call.1} parent=5 // pred_check
        _
      $region54: #{tpu_custom_call.1} parent=5 // pred_check_branch
        %315 = sbr.rel (%p312) target = $region56
      $region55: #{tpu_custom_call.1} parent=5 // pred_region
        %s316 = ssub.s32 %s18, 1
        // Predicated region
        $region57: #{tpu_custom_call.1} parent=55 // pred_check
          %p317 = pneg %p107
        $region58: #{tpu_custom_call.1} parent=55 // pred_check_branch
          %319 = sbr.rel (%p317) target = $region60
        $region59: #{tpu_custom_call.1} parent=55 // pred_region
          %320 = dma.done [#allocation4], 16384
        $region60: #{tpu_custom_call.1} parent=55 // pred_fallthru
          _
        // Predicated region
        $region61: #{tpu_custom_call.1} parent=55 // pred_check
          %p321 = pneg %p149
        $region62: #{tpu_custom_call.1} parent=55 // pred_check_branch
          %323 = sbr.rel (%p321) target = $region64
        $region63: #{tpu_custom_call.1} parent=55 // pred_region
          %324 = dma.done [#allocation6], 16384
        $region64: #{tpu_custom_call.1} parent=55 // pred_fallthru
          _
        %s325 = smul.u32 4, %s23
        %p326 = scmp.lt.s32.totalorder %s325, 7
        %s327 = scalar_select %p326, %s325, 7
        %s328 = smul.addr %s327, 8
        %s329 = scalar_lea.vmem %s0, %s328
        %p330 = pneg %p44
        %p331 = pneg %p41
        %p332 = pneg %p65
        %p333 = pneg %p62
        %p334 = pneg %p86
        %p335 = pneg %p83
        %p336 = pneg %p107
        %p337 = pneg %p104
        %p338 = pneg %p128
        %p339 = pneg %p125
        %p340 = pneg %p149
        %p341 = pneg %p146
        %p342 = pneg %p170
        %p343 = pneg %p167
        %p344 = pneg %p191
        %p345 = pneg %p188
        %p346 = pneg %p212
        %p347 = pneg %p209
        %p348 = pneg %p238
        %p349 = pneg %p235
        %s350 = smul.u32 4, %s23
        %p351 = scmp.lt.s32.totalorder %s350, 7
        %s352 = scalar_select %p351, %s350, 7
        %s353 = smul.addr %s352, 8
        %s354 = scalar_lea.vmem %s9, %s353
        %s355 = smul.u32 4, %s23
        %p356 = scmp.lt.s32.totalorder %s355, 7
        %s357 = scalar_select %p356, %s355, 7
        %s358 = smul.addr %s357, 8
        %s359 = scalar_lea.vmem %s0, %s358
        %s360 = smul.u32 4, %s23
        %s361 = smul.u32 4, %s23
        %p362 = scmp.lt.s32.totalorder %s361, 7
        %s363 = scalar_select %p362, %s361, 7
        %s364 = smul.addr %s363, 8
        %s365 = scalar_lea.vmem %s9, %s364
        %s366 = smul.u32 4, %s23
        %v367 = vld [vmem:[%s359] sm:$0xff]
        %v368 = vld [vmem:[%s359 + $0x8] sm:$0xff]
        %v369 = vld [vmem:[%s359 + $0x10] sm:$0xff]
        %v370 = vld [vmem:[%s359 + $0x18] sm:$0xff]
        %v371 = vld [vmem:[%s1] sm:$0xff]
        %373 = vset.pattern.permute.xlu0 0
        %374 = vperm.xlu0 %373, %v367
        %v375 = vpop.permute.xlu0 %374
        %378 = vset.pattern.permute.xlu0 0
        %379 = vperm.xlu0 %378, %v368
        %v380 = vpop.permute.xlu0 %379
        %383 = vset.pattern.permute.xlu0 0
        %384 = vperm.xlu0 %383, %v369
        %v385 = vpop.permute.xlu0 %384
        %388 = vset.pattern.permute.xlu0 0
        %389 = vperm.xlu0 %388, %v370
        %v390 = vpop.permute.xlu0 %389
        %v393 = vlaneseq
        %v394 = vshrl.u32 %v393, 7
        %v395 = vsub.s32 0, %v394
        %v396 = vrot.slane %v371, %v395
        %v397 = vlaneseq
        %v398 = vshrl.u32 %v397, 7
        %v399 = vsub.s32 2, %v398
        %v400 = vrot.slane %v371, %v399
        %v401 = vlaneseq
        %v402 = vshrl.u32 %v401, 7
        %v403 = vsub.s32 4, %v402
        %v404 = vrot.slane %v371, %v403
        %v405 = vlaneseq
        %v406 = vshrl.u32 %v405, 7
        %v407 = vsub.s32 6, %v406
        %v408 = vrot.slane %v371, %v407
        %v413 = vlaneseq
        %v414 = vshrl.u32 %v413, 7
        %v415 = vsub.s32 0, %v414
        %v416 = vrot.slane %v396, %v415
        %v417 = vlaneseq
        %v418 = vshrl.u32 %v417, 7
        %v419 = vsub.s32 0, %v418
        %v420 = vrot.slane %v400, %v419
        %v421 = vlaneseq
        %v422 = vshrl.u32 %v421, 7
        %v423 = vsub.s32 0, %v422
        %v424 = vrot.slane %v404, %v423
        %v425 = vlaneseq
        %v426 = vshrl.u32 %v425, 7
        %v427 = vsub.s32 0, %v426
        %v428 = vrot.slane %v408, %v427
        %v429 = vmul.f32 %v375, %v416
        %v430 = vmul.f32 %v375, %v420
        %v431 = vmul.f32 %v375, %v424
        %v432 = vmul.f32 %v375, %v428
        %v433 = vmul.f32 %v380, %v416
        %v434 = vmul.f32 %v380, %v420
        %v435 = vmul.f32 %v380, %v424
        %v436 = vmul.f32 %v380, %v428
        %v437 = vmul.f32 %v385, %v416
        %v438 = vmul.f32 %v385, %v420
        %v439 = vmul.f32 %v385, %v424
        %v440 = vmul.f32 %v385, %v428
        %v441 = vmul.f32 %v390, %v416
        %v442 = vmul.f32 %v390, %v420
        %v443 = vmul.f32 %v390, %v424
        %v444 = vmul.f32 %v390, %v428
        %445 = vset.pattern.permute.xlu0 1
        %446 = vperm.xlu0 %445, %v367
        %v447 = vpop.permute.xlu0 %446
        %449 = vset.pattern.permute.xlu0 1
        %450 = vperm.xlu0 %449, %v368
        %v451 = vpop.permute.xlu0 %450
        %453 = vset.pattern.permute.xlu0 1
        %454 = vperm.xlu0 %453, %v369
        %v455 = vpop.permute.xlu0 %454
        %457 = vset.pattern.permute.xlu0 1
        %458 = vperm.xlu0 %457, %v370
        %v459 = vpop.permute.xlu0 %458
        %v461 = vlaneseq
        %v462 = vshrl.u32 %v461, 7
        %v463 = vsub.s32 1, %v462
        %v464 = vrot.slane %v371, %v463
        %v465 = vlaneseq
        %v466 = vshrl.u32 %v465, 7
        %v467 = vsub.s32 3, %v466
        %v468 = vrot.slane %v371, %v467
        %v469 = vlaneseq
        %v470 = vshrl.u32 %v469, 7
        %v471 = vsub.s32 5, %v470
        %v472 = vrot.slane %v371, %v471
        %v473 = vlaneseq
        %v474 = vshrl.u32 %v473, 7
        %v475 = vsub.s32 7, %v474
        %v476 = vrot.slane %v371, %v475
        %v481 = vlaneseq
        %v482 = vshrl.u32 %v481, 7
        %v483 = vsub.s32 1, %v482
        %v484 = vrot.slane %v464, %v483
        %v485 = vlaneseq
        %v486 = vshrl.u32 %v485, 7
        %v487 = vsub.s32 1, %v486
        %v488 = vrot.slane %v468, %v487
        %v489 = vlaneseq
        %v490 = vshrl.u32 %v489, 7
        %v491 = vsub.s32 1, %v490
        %v492 = vrot.slane %v472, %v491
        %v493 = vlaneseq
        %v494 = vshrl.u32 %v493, 7
        %v495 = vsub.s32 1, %v494
        %v496 = vrot.slane %v476, %v495
        %v497 = vmul.f32 %v447, %v484
        %v498 = vmul.f32 %v447, %v488
        %v499 = vmul.f32 %v447, %v492
        %v500 = vmul.f32 %v447, %v496
        %v501 = vmul.f32 %v451, %v484
        %v502 = vmul.f32 %v451, %v488
        %v503 = vmul.f32 %v451, %v492
        %v504 = vmul.f32 %v451, %v496
        %v505 = vmul.f32 %v455, %v484
        %v506 = vmul.f32 %v455, %v488
        %v507 = vmul.f32 %v455, %v492
        %v508 = vmul.f32 %v455, %v496
        %v509 = vmul.f32 %v459, %v484
        %v510 = vmul.f32 %v459, %v488
        %v511 = vmul.f32 %v459, %v492
        %v512 = vmul.f32 %v459, %v496
        %v513 = vadd.f32 %v429, %v497
        %v514 = vadd.f32 %v430, %v498
        %v515 = vadd.f32 %v431, %v499
        %v516 = vadd.f32 %v432, %v500
        %v517 = vadd.f32 %v433, %v501
        %v518 = vadd.f32 %v434, %v502
        %v519 = vadd.f32 %v435, %v503
        %v520 = vadd.f32 %v436, %v504
        %v521 = vadd.f32 %v437, %v505
        %v522 = vadd.f32 %v438, %v506
        %v523 = vadd.f32 %v439, %v507
        %v524 = vadd.f32 %v440, %v508
        %v525 = vadd.f32 %v441, %v509
        %v526 = vadd.f32 %v442, %v510
        %v527 = vadd.f32 %v443, %v511
        %v528 = vadd.f32 %v444, %v512
        %v529 = vld [vmem:[%s2] sm:$0xf]
        %v531 = vlaneseq
        %v532 = vshrl.u32 %v531, 7
        %v533 = vsub.s32 0, %v532
        %v534 = vrot.slane %v529, %v533
        %v535 = vlaneseq
        %v536 = vshrl.u32 %v535, 7
        %v537 = vsub.s32 1, %v536
        %v538 = vrot.slane %v529, %v537
        %v539 = vlaneseq
        %v540 = vshrl.u32 %v539, 7
        %v541 = vsub.s32 2, %v540
        %v542 = vrot.slane %v529, %v541
        %v543 = vlaneseq
        %v544 = vshrl.u32 %v543, 7
        %v545 = vsub.s32 3, %v544
        %v546 = vrot.slane %v529, %v545
        %v551 = vadd.f32 %v513, %v534
        %v552 = vadd.f32 %v514, %v538
        %v553 = vadd.f32 %v515, %v542
        %v554 = vadd.f32 %v516, %v546
        %v555 = vadd.f32 %v517, %v534
        %v556 = vadd.f32 %v518, %v538
        %v557 = vadd.f32 %v519, %v542
        %v558 = vadd.f32 %v520, %v546
        %v559 = vadd.f32 %v521, %v534
        %v560 = vadd.f32 %v522, %v538
        %v561 = vadd.f32 %v523, %v542
        %v562 = vadd.f32 %v524, %v546
        %v563 = vadd.f32 %v525, %v534
        %v564 = vadd.f32 %v526, %v538
        %v565 = vadd.f32 %v527, %v542
        %v566 = vadd.f32 %v528, %v546
        %v567 = vmax.f32 %v551, 0.0
        %v568 = vmax.f32 %v552, 0.0
        %v569 = vmax.f32 %v553, 0.0
        %v570 = vmax.f32 %v554, 0.0
        %v571 = vmax.f32 %v555, 0.0
        %v572 = vmax.f32 %v556, 0.0
        %v573 = vmax.f32 %v557, 0.0
        %v574 = vmax.f32 %v558, 0.0
        %v575 = vmax.f32 %v559, 0.0
        %v576 = vmax.f32 %v560, 0.0
        %v577 = vmax.f32 %v561, 0.0
        %v578 = vmax.f32 %v562, 0.0
        %v579 = vmax.f32 %v563, 0.0
        %v580 = vmax.f32 %v564, 0.0
        %v581 = vmax.f32 %v565, 0.0
        %v582 = vmax.f32 %v566, 0.0
        %v583 = vpack.c.bf16 %v571, %v567
        %v584 = vpack.c.bf16 %v572, %v568
        %v585 = vpack.c.bf16 %v573, %v569
        %v586 = vpack.c.bf16 %v574, %v570
        %v587 = vpack.c.bf16 %v579, %v575
        %v588 = vpack.c.bf16 %v580, %v576
        %v589 = vpack.c.bf16 %v581, %v577
        %v590 = vpack.c.bf16 %v582, %v578
        %v591 = vld [vmem:[#allocation3] sm:$0xff]
        %v592 = vld [vmem:[#allocation3 + $0x8] sm:$0xff]
        %v593 = vld [vmem:[#allocation3 + $0x10] sm:$0xff]
        %v594 = vld [vmem:[#allocation3 + $0x18] sm:$0xff]
        %v595 = vld [vmem:[#allocation3 + $0x20] sm:$0xff]
        %v596 = vld [vmem:[#allocation3 + $0x28] sm:$0xff]
        %v597 = vld [vmem:[#allocation3 + $0x30] sm:$0xff]
        %v598 = vld [vmem:[#allocation3 + $0x38] sm:$0xff]
        %v599 = vld [vmem:[#allocation3 + $0x40] sm:$0xff]
        %v600 = vld [vmem:[#allocation3 + $0x48] sm:$0xff]
        %v601 = vld [vmem:[#allocation3 + $0x50] sm:$0xff]
        %v602 = vld [vmem:[#allocation3 + $0x58] sm:$0xff]
        %v603 = vld [vmem:[#allocation3 + $0x60] sm:$0xff]
        %v604 = vld [vmem:[#allocation3 + $0x68] sm:$0xff]
        %v605 = vld [vmem:[#allocation3 + $0x70] sm:$0xff]
        %v606 = vld [vmem:[#allocation3 + $0x78] sm:$0xff]
        %v607 = vld [vmem:[#allocation3 + $0x80] sm:$0xff]
        %v608 = vld [vmem:[#allocation3 + $0x88] sm:$0xff]
        %v609 = vld [vmem:[#allocation3 + $0x90] sm:$0xff]
        %v610 = vld [vmem:[#allocation3 + $0x98] sm:$0xff]
        %v611 = vld [vmem:[#allocation3 + $0xa0] sm:$0xff]
        %v612 = vld [vmem:[#allocation3 + $0xa8] sm:$0xff]
        %v613 = vld [vmem:[#allocation3 + $0xb0] sm:$0xff]
        %v614 = vld [vmem:[#allocation3 + $0xb8] sm:$0xff]
        %v615 = vld [vmem:[#allocation3 + $0xc0] sm:$0xff]
        %v616 = vld [vmem:[#allocation3 + $0xc8] sm:$0xff]
        %v617 = vld [vmem:[#allocation3 + $0xd0] sm:$0xff]
        %v618 = vld [vmem:[#allocation3 + $0xd8] sm:$0xff]
        %v619 = vld [vmem:[#allocation3 + $0xe0] sm:$0xff]
        %v620 = vld [vmem:[#allocation3 + $0xe8] sm:$0xff]
        %v621 = vld [vmem:[#allocation3 + $0xf0] sm:$0xff]
        %v622 = vld [vmem:[#allocation3 + $0xf8] sm:$0xff]
        %v623 = vld [vmem:[#allocation3 + $0x100] sm:$0xff]
        %v624 = vld [vmem:[#allocation3 + $0x108] sm:$0xff]
        %v625 = vld [vmem:[#allocation3 + $0x110] sm:$0xff]
        %v626 = vld [vmem:[#allocation3 + $0x118] sm:$0xff]
        %v627 = vld [vmem:[#allocation3 + $0x120] sm:$0xff]
        %v628 = vld [vmem:[#allocation3 + $0x128] sm:$0xff]
        %v629 = vld [vmem:[#allocation3 + $0x130] sm:$0xff]
        %v630 = vld [vmem:[#allocation3 + $0x138] sm:$0xff]
        %v631 = vld [vmem:[#allocation3 + $0x140] sm:$0xff]
        %v632 = vld [vmem:[#allocation3 + $0x148] sm:$0xff]
        %v633 = vld [vmem:[#allocation3 + $0x150] sm:$0xff]
        %v634 = vld [vmem:[#allocation3 + $0x158] sm:$0xff]
        %v635 = vld [vmem:[#allocation3 + $0x160] sm:$0xff]
        %v636 = vld [vmem:[#allocation3 + $0x168] sm:$0xff]
        %v637 = vld [vmem:[#allocation3 + $0x170] sm:$0xff]
        %v638 = vld [vmem:[#allocation3 + $0x178] sm:$0xff]
        %v639 = vld [vmem:[#allocation3 + $0x180] sm:$0xff]
        %v640 = vld [vmem:[#allocation3 + $0x188] sm:$0xff]
        %v641 = vld [vmem:[#allocation3 + $0x190] sm:$0xff]
        %v642 = vld [vmem:[#allocation3 + $0x198] sm:$0xff]
        %v643 = vld [vmem:[#allocation3 + $0x1a0] sm:$0xff]
        %v644 = vld [vmem:[#allocation3 + $0x1a8] sm:$0xff]
        %v645 = vld [vmem:[#allocation3 + $0x1b0] sm:$0xff]
        %v646 = vld [vmem:[#allocation3 + $0x1b8] sm:$0xff]
        %v647 = vld [vmem:[#allocation3 + $0x1c0] sm:$0xff]
        %v648 = vld [vmem:[#allocation3 + $0x1c8] sm:$0xff]
        %v649 = vld [vmem:[#allocation3 + $0x1d0] sm:$0xff]
        %v650 = vld [vmem:[#allocation3 + $0x1d8] sm:$0xff]
        %v651 = vld [vmem:[#allocation3 + $0x1e0] sm:$0xff]
        %v652 = vld [vmem:[#allocation3 + $0x1e8] sm:$0xff]
        %v653 = vld [vmem:[#allocation3 + $0x1f0] sm:$0xff]
        %v654 = vld [vmem:[#allocation3 + $0x1f8] sm:$0xff]
        %v655 = vld [vmem:[#allocation3 + $0x200] sm:$0xff]
        %v656 = vld [vmem:[#allocation3 + $0x208] sm:$0xff]
        %v657 = vld [vmem:[#allocation3 + $0x210] sm:$0xff]
        %v658 = vld [vmem:[#allocation3 + $0x218] sm:$0xff]
        %v659 = vld [vmem:[#allocation3 + $0x220] sm:$0xff]
        %v660 = vld [vmem:[#allocation3 + $0x228] sm:$0xff]
        %v661 = vld [vmem:[#allocation3 + $0x230] sm:$0xff]
        %v662 = vld [vmem:[#allocation3 + $0x238] sm:$0xff]
        %v663 = vld [vmem:[#allocation3 + $0x240] sm:$0xff]
        %v664 = vld [vmem:[#allocation3 + $0x248] sm:$0xff]
        %v665 = vld [vmem:[#allocation3 + $0x250] sm:$0xff]
        %v666 = vld [vmem:[#allocation3 + $0x258] sm:$0xff]
        %v667 = vld [vmem:[#allocation3 + $0x260] sm:$0xff]
        %v668 = vld [vmem:[#allocation3 + $0x268] sm:$0xff]
        %v669 = vld [vmem:[#allocation3 + $0x270] sm:$0xff]
        %v670 = vld [vmem:[#allocation3 + $0x278] sm:$0xff]
        %v671 = vld [vmem:[#allocation3 + $0x280] sm:$0xff]
        %v672 = vld [vmem:[#allocation3 + $0x288] sm:$0xff]
        %v673 = vld [vmem:[#allocation3 + $0x290] sm:$0xff]
        %v674 = vld [vmem:[#allocation3 + $0x298] sm:$0xff]
        %v675 = vld [vmem:[#allocation3 + $0x2a0] sm:$0xff]
        %v676 = vld [vmem:[#allocation3 + $0x2a8] sm:$0xff]
        %v677 = vld [vmem:[#allocation3 + $0x2b0] sm:$0xff]
        %v678 = vld [vmem:[#allocation3 + $0x2b8] sm:$0xff]
        %v679 = vld [vmem:[#allocation3 + $0x2c0] sm:$0xff]
        %v680 = vld [vmem:[#allocation3 + $0x2c8] sm:$0xff]
        %v681 = vld [vmem:[#allocation3 + $0x2d0] sm:$0xff]
        %v682 = vld [vmem:[#allocation3 + $0x2d8] sm:$0xff]
        %v683 = vld [vmem:[#allocation3 + $0x2e0] sm:$0xff]
        %v684 = vld [vmem:[#allocation3 + $0x2e8] sm:$0xff]
        %v685 = vld [vmem:[#allocation3 + $0x2f0] sm:$0xff]
        %v686 = vld [vmem:[#allocation3 + $0x2f8] sm:$0xff]
        %v687 = vld [vmem:[#allocation3 + $0x300] sm:$0xff]
        %v688 = vld [vmem:[#allocation3 + $0x308] sm:$0xff]
        %v689 = vld [vmem:[#allocation3 + $0x310] sm:$0xff]
        %v690 = vld [vmem:[#allocation3 + $0x318] sm:$0xff]
        %v691 = vld [vmem:[#allocation3 + $0x320] sm:$0xff]
        %v692 = vld [vmem:[#allocation3 + $0x328] sm:$0xff]
        %v693 = vld [vmem:[#allocation3 + $0x330] sm:$0xff]
        %v694 = vld [vmem:[#allocation3 + $0x338] sm:$0xff]
        %v695 = vld [vmem:[#allocation3 + $0x340] sm:$0xff]
        %v696 = vld [vmem:[#allocation3 + $0x348] sm:$0xff]
        %v697 = vld [vmem:[#allocation3 + $0x350] sm:$0xff]
        %v698 = vld [vmem:[#allocation3 + $0x358] sm:$0xff]
        %v699 = vld [vmem:[#allocation3 + $0x360] sm:$0xff]
        %v700 = vld [vmem:[#allocation3 + $0x368] sm:$0xff]
        %v701 = vld [vmem:[#allocation3 + $0x370] sm:$0xff]
        %v702 = vld [vmem:[#allocation3 + $0x378] sm:$0xff]
        %v703 = vld [vmem:[#allocation3 + $0x380] sm:$0xff]
        %v704 = vld [vmem:[#allocation3 + $0x388] sm:$0xff]
        %v705 = vld [vmem:[#allocation3 + $0x390] sm:$0xff]
        %v706 = vld [vmem:[#allocation3 + $0x398] sm:$0xff]
        %v707 = vld [vmem:[#allocation3 + $0x3a0] sm:$0xff]
        %v708 = vld [vmem:[#allocation3 + $0x3a8] sm:$0xff]
        %v709 = vld [vmem:[#allocation3 + $0x3b0] sm:$0xff]
        %v710 = vld [vmem:[#allocation3 + $0x3b8] sm:$0xff]
        %v711 = vld [vmem:[#allocation3 + $0x3c0] sm:$0xff]
        %v712 = vld [vmem:[#allocation3 + $0x3c8] sm:$0xff]
        %v713 = vld [vmem:[#allocation3 + $0x3d0] sm:$0xff]
        %v714 = vld [vmem:[#allocation3 + $0x3d8] sm:$0xff]
        %v715 = vld [vmem:[#allocation3 + $0x3e0] sm:$0xff]
        %v716 = vld [vmem:[#allocation3 + $0x3e8] sm:$0xff]
        %v717 = vld [vmem:[#allocation3 + $0x3f0] sm:$0xff]
        %v718 = vld [vmem:[#allocation3 + $0x3f8] sm:$0xff]
        %v719 = vld [vmem:[%s4] sm:$0xf]
        %v721 = vlaneseq
        %v722 = vshrl.u32 %v721, 7
        %v723 = vsub.s32 0, %v722
        %v724 = vrot.slane %v719, %v723
        %v725 = vlaneseq
        %v726 = vshrl.u32 %v725, 7
        %v727 = vsub.s32 1, %v726
        %v728 = vrot.slane %v719, %v727
        %v729 = vlaneseq
        %v730 = vshrl.u32 %v729, 7
        %v731 = vsub.s32 2, %v730
        %v732 = vrot.slane %v719, %v731
        %v733 = vlaneseq
        %v734 = vshrl.u32 %v733, 7
        %v735 = vsub.s32 3, %v734
        %v736 = vrot.slane %v719, %v735
        %v869 = vunpack.c.l.b16 %v591
        %v870 = vunpack.c.h.b16 %v591
        %v871 = vunpack.c.l.b16 %v592
        %v872 = vunpack.c.h.b16 %v592
        %v873 = vunpack.c.l.b16 %v593
        %v874 = vunpack.c.h.b16 %v593
        %v875 = vunpack.c.l.b16 %v594
        %v876 = vunpack.c.h.b16 %v594
        %v877 = vunpack.c.l.b16 %v595
        %v878 = vunpack.c.h.b16 %v595
        %v879 = vunpack.c.l.b16 %v596
        %v880 = vunpack.c.h.b16 %v596
        %v881 = vunpack.c.l.b16 %v597
        %v882 = vunpack.c.h.b16 %v597
        %v883 = vunpack.c.l.b16 %v598
        %v884 = vunpack.c.h.b16 %v598
        %v885 = vunpack.c.l.b16 %v599
        %v886 = vunpack.c.h.b16 %v599
        %v887 = vunpack.c.l.b16 %v600
        %v888 = vunpack.c.h.b16 %v600
        %v889 = vunpack.c.l.b16 %v601
        %v890 = vunpack.c.h.b16 %v601
        %v891 = vunpack.c.l.b16 %v602
        %v892 = vunpack.c.h.b16 %v602
        %v893 = vunpack.c.l.b16 %v603
        %v894 = vunpack.c.h.b16 %v603
        %v895 = vunpack.c.l.b16 %v604
        %v896 = vunpack.c.h.b16 %v604
        %v897 = vunpack.c.l.b16 %v605
        %v898 = vunpack.c.h.b16 %v605
        %v899 = vunpack.c.l.b16 %v606
        %v900 = vunpack.c.h.b16 %v606
        %v901 = vunpack.c.l.b16 %v607
        %v902 = vunpack.c.h.b16 %v607
        %v903 = vunpack.c.l.b16 %v608
        %v904 = vunpack.c.h.b16 %v608
        %v905 = vunpack.c.l.b16 %v609
        %v906 = vunpack.c.h.b16 %v609
        %v907 = vunpack.c.l.b16 %v610
        %v908 = vunpack.c.h.b16 %v610
        %v909 = vunpack.c.l.b16 %v611
        %v910 = vunpack.c.h.b16 %v611
        %v911 = vunpack.c.l.b16 %v612
        %v912 = vunpack.c.h.b16 %v612
        %v913 = vunpack.c.l.b16 %v613
        %v914 = vunpack.c.h.b16 %v613
        %v915 = vunpack.c.l.b16 %v614
        %v916 = vunpack.c.h.b16 %v614
        %v917 = vunpack.c.l.b16 %v615
        %v918 = vunpack.c.h.b16 %v615
        %v919 = vunpack.c.l.b16 %v616
        %v920 = vunpack.c.h.b16 %v616
        %v921 = vunpack.c.l.b16 %v617
        %v922 = vunpack.c.h.b16 %v617
        %v923 = vunpack.c.l.b16 %v618
        %v924 = vunpack.c.h.b16 %v618
        %v925 = vunpack.c.l.b16 %v619
        %v926 = vunpack.c.h.b16 %v619
        %v927 = vunpack.c.l.b16 %v620
        %v928 = vunpack.c.h.b16 %v620
        %v929 = vunpack.c.l.b16 %v621
        %v930 = vunpack.c.h.b16 %v621
        %v931 = vunpack.c.l.b16 %v622
        %v932 = vunpack.c.h.b16 %v622
        %v933 = vunpack.c.l.b16 %v623
        %v934 = vunpack.c.h.b16 %v623
        %v935 = vunpack.c.l.b16 %v624
        %v936 = vunpack.c.h.b16 %v624
        %v937 = vunpack.c.l.b16 %v625
        %v938 = vunpack.c.h.b16 %v625
        %v939 = vunpack.c.l.b16 %v626
        %v940 = vunpack.c.h.b16 %v626
        %v941 = vunpack.c.l.b16 %v627
        %v942 = vunpack.c.h.b16 %v627
        %v943 = vunpack.c.l.b16 %v628
        %v944 = vunpack.c.h.b16 %v628
        %v945 = vunpack.c.l.b16 %v629
        %v946 = vunpack.c.h.b16 %v629
        %v947 = vunpack.c.l.b16 %v630
        %v948 = vunpack.c.h.b16 %v630
        %v949 = vunpack.c.l.b16 %v631
        %v950 = vunpack.c.h.b16 %v631
        %v951 = vunpack.c.l.b16 %v632
        %v952 = vunpack.c.h.b16 %v632
        %v953 = vunpack.c.l.b16 %v633
        %v954 = vunpack.c.h.b16 %v633
        %v955 = vunpack.c.l.b16 %v634
        %v956 = vunpack.c.h.b16 %v634
        %v957 = vunpack.c.l.b16 %v635
        %v958 = vunpack.c.h.b16 %v635
        %v959 = vunpack.c.l.b16 %v636
        %v960 = vunpack.c.h.b16 %v636
        %v961 = vunpack.c.l.b16 %v637
        %v962 = vunpack.c.h.b16 %v637
        %v963 = vunpack.c.l.b16 %v638
        %v964 = vunpack.c.h.b16 %v638
        %v965 = vunpack.c.l.b16 %v639
        %v966 = vunpack.c.h.b16 %v639
        %v967 = vunpack.c.l.b16 %v640
        %v968 = vunpack.c.h.b16 %v640
        %v969 = vunpack.c.l.b16 %v641
        %v970 = vunpack.c.h.b16 %v641
        %v971 = vunpack.c.l.b16 %v642
        %v972 = vunpack.c.h.b16 %v642
        %v973 = vunpack.c.l.b16 %v643
        %v974 = vunpack.c.h.b16 %v643
        %v975 = vunpack.c.l.b16 %v644
        %v976 = vunpack.c.h.b16 %v644
        %v977 = vunpack.c.l.b16 %v645
        %v978 = vunpack.c.h.b16 %v645
        %v979 = vunpack.c.l.b16 %v646
        %v980 = vunpack.c.h.b16 %v646
        %v981 = vunpack.c.l.b16 %v647
        %v982 = vunpack.c.h.b16 %v647
        %v983 = vunpack.c.l.b16 %v648
        %v984 = vunpack.c.h.b16 %v648
        %v985 = vunpack.c.l.b16 %v649
        %v986 = vunpack.c.h.b16 %v649
        %v987 = vunpack.c.l.b16 %v650
        %v988 = vunpack.c.h.b16 %v650
        %v989 = vunpack.c.l.b16 %v651
        %v990 = vunpack.c.h.b16 %v651
        %v991 = vunpack.c.l.b16 %v652
        %v992 = vunpack.c.h.b16 %v652
        %v993 = vunpack.c.l.b16 %v653
        %v994 = vunpack.c.h.b16 %v653
        %v995 = vunpack.c.l.b16 %v654
        %v996 = vunpack.c.h.b16 %v654
        %v997 = vunpack.c.l.b16 %v655
        %v998 = vunpack.c.h.b16 %v655
        %v999 = vunpack.c.l.b16 %v656
        %v1000 = vunpack.c.h.b16 %v656
        %v1001 = vunpack.c.l.b16 %v657
        %v1002 = vunpack.c.h.b16 %v657
        %v1003 = vunpack.c.l.b16 %v658
        %v1004 = vunpack.c.h.b16 %v658
        %v1005 = vunpack.c.l.b16 %v659
        %v1006 = vunpack.c.h.b16 %v659
        %v1007 = vunpack.c.l.b16 %v660
        %v1008 = vunpack.c.h.b16 %v660
        %v1009 = vunpack.c.l.b16 %v661
        %v1010 = vunpack.c.h.b16 %v661
        %v1011 = vunpack.c.l.b16 %v662
        %v1012 = vunpack.c.h.b16 %v662
        %v1013 = vunpack.c.l.b16 %v663
        %v1014 = vunpack.c.h.b16 %v663
        %v1015 = vunpack.c.l.b16 %v664
        %v1016 = vunpack.c.h.b16 %v664
        %v1017 = vunpack.c.l.b16 %v665
        %v1018 = vunpack.c.h.b16 %v665
        %v1019 = vunpack.c.l.b16 %v666
        %v1020 = vunpack.c.h.b16 %v666
        %v1021 = vunpack.c.l.b16 %v667
        %v1022 = vunpack.c.h.b16 %v667
        %v1023 = vunpack.c.l.b16 %v668
        %v1024 = vunpack.c.h.b16 %v668
        %v1025 = vunpack.c.l.b16 %v669
        %v1026 = vunpack.c.h.b16 %v669
        %v1027 = vunpack.c.l.b16 %v670
        %v1028 = vunpack.c.h.b16 %v670
        %v1029 = vunpack.c.l.b16 %v671
        %v1030 = vunpack.c.h.b16 %v671
        %v1031 = vunpack.c.l.b16 %v672
        %v1032 = vunpack.c.h.b16 %v672
        %v1033 = vunpack.c.l.b16 %v673
        %v1034 = vunpack.c.h.b16 %v673
        %v1035 = vunpack.c.l.b16 %v674
        %v1036 = vunpack.c.h.b16 %v674
        %v1037 = vunpack.c.l.b16 %v675
        %v1038 = vunpack.c.h.b16 %v675
        %v1039 = vunpack.c.l.b16 %v676
        %v1040 = vunpack.c.h.b16 %v676
        %v1041 = vunpack.c.l.b16 %v677
        %v1042 = vunpack.c.h.b16 %v677
        %v1043 = vunpack.c.l.b16 %v678
        %v1044 = vunpack.c.h.b16 %v678
        %v1045 = vunpack.c.l.b16 %v679
        %v1046 = vunpack.c.h.b16 %v679
        %v1047 = vunpack.c.l.b16 %v680
        %v1048 = vunpack.c.h.b16 %v680
        %v1049 = vunpack.c.l.b16 %v681
        %v1050 = vunpack.c.h.b16 %v681
        %v1051 = vunpack.c.l.b16 %v682
        %v1052 = vunpack.c.h.b16 %v682
        %v1053 = vunpack.c.l.b16 %v683
        %v1054 = vunpack.c.h.b16 %v683
        %v1055 = vunpack.c.l.b16 %v684
        %v1056 = vunpack.c.h.b16 %v684
        %v1057 = vunpack.c.l.b16 %v685
        %v1058 = vunpack.c.h.b16 %v685
        %v1059 = vunpack.c.l.b16 %v686
        %v1060 = vunpack.c.h.b16 %v686
        %v1061 = vunpack.c.l.b16 %v687
        %v1062 = vunpack.c.h.b16 %v687
        %v1063 = vunpack.c.l.b16 %v688
        %v1064 = vunpack.c.h.b16 %v688
        %v1065 = vunpack.c.l.b16 %v689
        %v1066 = vunpack.c.h.b16 %v689
        %v1067 = vunpack.c.l.b16 %v690
        %v1068 = vunpack.c.h.b16 %v690
        %v1069 = vunpack.c.l.b16 %v691
        %v1070 = vunpack.c.h.b16 %v691
        %v1071 = vunpack.c.l.b16 %v692
        %v1072 = vunpack.c.h.b16 %v692
        %v1073 = vunpack.c.l.b16 %v693
        %v1074 = vunpack.c.h.b16 %v693
        %v1075 = vunpack.c.l.b16 %v694
        %v1076 = vunpack.c.h.b16 %v694
        %v1077 = vunpack.c.l.b16 %v695
        %v1078 = vunpack.c.h.b16 %v695
        %v1079 = vunpack.c.l.b16 %v696
        %v1080 = vunpack.c.h.b16 %v696
        %v1081 = vunpack.c.l.b16 %v697
        %v1082 = vunpack.c.h.b16 %v697
        %v1083 = vunpack.c.l.b16 %v698
        %v1084 = vunpack.c.h.b16 %v698
        %v1085 = vunpack.c.l.b16 %v699
        %v1086 = vunpack.c.h.b16 %v699
        %v1087 = vunpack.c.l.b16 %v700
        %v1088 = vunpack.c.h.b16 %v700
        %v1089 = vunpack.c.l.b16 %v701
        %v1090 = vunpack.c.h.b16 %v701
        %v1091 = vunpack.c.l.b16 %v702
        %v1092 = vunpack.c.h.b16 %v702
        %v1093 = vunpack.c.l.b16 %v703
        %v1094 = vunpack.c.h.b16 %v703
        %v1095 = vunpack.c.l.b16 %v704
        %v1096 = vunpack.c.h.b16 %v704
        %v1097 = vunpack.c.l.b16 %v705
        %v1098 = vunpack.c.h.b16 %v705
        %v1099 = vunpack.c.l.b16 %v706
        %v1100 = vunpack.c.h.b16 %v706
        %v1101 = vunpack.c.l.b16 %v707
        %v1102 = vunpack.c.h.b16 %v707
        %v1103 = vunpack.c.l.b16 %v708
        %v1104 = vunpack.c.h.b16 %v708
        %v1105 = vunpack.c.l.b16 %v709
        %v1106 = vunpack.c.h.b16 %v709
        %v1107 = vunpack.c.l.b16 %v710
        %v1108 = vunpack.c.h.b16 %v710
        %v1109 = vunpack.c.l.b16 %v711
        %v1110 = vunpack.c.h.b16 %v711
        %v1111 = vunpack.c.l.b16 %v712
        %v1112 = vunpack.c.h.b16 %v712
        %v1113 = vunpack.c.l.b16 %v713
        %v1114 = vunpack.c.h.b16 %v713
        %v1115 = vunpack.c.l.b16 %v714
        %v1116 = vunpack.c.h.b16 %v714
        %v1117 = vunpack.c.l.b16 %v715
        %v1118 = vunpack.c.h.b16 %v715
        %v1119 = vunpack.c.l.b16 %v716
        %v1120 = vunpack.c.h.b16 %v716
        %v1121 = vunpack.c.l.b16 %v717
        %v1122 = vunpack.c.h.b16 %v717
        %v1123 = vunpack.c.l.b16 %v718
        %v1124 = vunpack.c.h.b16 %v718
        %v1125 = vpack.c.b16 %v873, %v869
        %v1126 = vpack.c.b16 %v874, %v870
        %v1127 = vpack.c.b16 %v875, %v871
        %v1128 = vpack.c.b16 %v876, %v872
        %v1129 = vpack.c.b16 %v881, %v877
        %v1130 = vpack.c.b16 %v882, %v878
        %v1131 = vpack.c.b16 %v883, %v879
        %v1132 = vpack.c.b16 %v884, %v880
        %v1133 = vpack.c.b16 %v889, %v885
        %v1134 = vpack.c.b16 %v890, %v886
        %v1135 = vpack.c.b16 %v891, %v887
        %v1136 = vpack.c.b16 %v892, %v888
        %v1137 = vpack.c.b16 %v897, %v893
        %v1138 = vpack.c.b16 %v898, %v894
        %v1139 = vpack.c.b16 %v899, %v895
        %v1140 = vpack.c.b16 %v900, %v896
        %v1141 = vpack.c.b16 %v905, %v901
        %v1142 = vpack.c.b16 %v906, %v902
        %v1143 = vpack.c.b16 %v907, %v903
        %v1144 = vpack.c.b16 %v908, %v904
        %v1145 = vpack.c.b16 %v913, %v909
        %v1146 = vpack.c.b16 %v914, %v910
        %v1147 = vpack.c.b16 %v915, %v911
        %v1148 = vpack.c.b16 %v916, %v912
        %v1149 = vpack.c.b16 %v921, %v917
        %v1150 = vpack.c.b16 %v922, %v918
        %v1151 = vpack.c.b16 %v923, %v919
        %v1152 = vpack.c.b16 %v924, %v920
        %v1153 = vpack.c.b16 %v929, %v925
        %v1154 = vpack.c.b16 %v930, %v926
        %v1155 = vpack.c.b16 %v931, %v927
        %v1156 = vpack.c.b16 %v932, %v928
        %v1157 = vpack.c.b16 %v937, %v933
        %v1158 = vpack.c.b16 %v938, %v934
        %v1159 = vpack.c.b16 %v939, %v935
        %v1160 = vpack.c.b16 %v940, %v936
        %v1161 = vpack.c.b16 %v945, %v941
        %v1162 = vpack.c.b16 %v946, %v942
        %v1163 = vpack.c.b16 %v947, %v943
        %v1164 = vpack.c.b16 %v948, %v944
        %v1165 = vpack.c.b16 %v953, %v949
        %v1166 = vpack.c.b16 %v954, %v950
        %v1167 = vpack.c.b16 %v955, %v951
        %v1168 = vpack.c.b16 %v956, %v952
        %v1169 = vpack.c.b16 %v961, %v957
        %v1170 = vpack.c.b16 %v962, %v958
        %v1171 = vpack.c.b16 %v963, %v959
        %v1172 = vpack.c.b16 %v964, %v960
        %v1173 = vpack.c.b16 %v969, %v965
        %v1174 = vpack.c.b16 %v970, %v966
        %v1175 = vpack.c.b16 %v971, %v967
        %v1176 = vpack.c.b16 %v972, %v968
        %v1177 = vpack.c.b16 %v977, %v973
        %v1178 = vpack.c.b16 %v978, %v974
        %v1179 = vpack.c.b16 %v979, %v975
        %v1180 = vpack.c.b16 %v980, %v976
        %v1181 = vpack.c.b16 %v985, %v981
        %v1182 = vpack.c.b16 %v986, %v982
        %v1183 = vpack.c.b16 %v987, %v983
        %v1184 = vpack.c.b16 %v988, %v984
        %v1185 = vpack.c.b16 %v993, %v989
        %v1186 = vpack.c.b16 %v994, %v990
        %v1187 = vpack.c.b16 %v995, %v991
        %v1188 = vpack.c.b16 %v996, %v992
        %v1189 = vpack.c.b16 %v1001, %v997
        %v1190 = vpack.c.b16 %v1002, %v998
        %v1191 = vpack.c.b16 %v1003, %v999
        %v1192 = vpack.c.b16 %v1004, %v1000
        %v1193 = vpack.c.b16 %v1009, %v1005
        %v1194 = vpack.c.b16 %v1010, %v1006
        %v1195 = vpack.c.b16 %v1011, %v1007
        %v1196 = vpack.c.b16 %v1012, %v1008
        %v1197 = vpack.c.b16 %v1017, %v1013
        %v1198 = vpack.c.b16 %v1018, %v1014
        %v1199 = vpack.c.b16 %v1019, %v1015
        %v1200 = vpack.c.b16 %v1020, %v1016
        %v1201 = vpack.c.b16 %v1025, %v1021
        %v1202 = vpack.c.b16 %v1026, %v1022
        %v1203 = vpack.c.b16 %v1027, %v1023
        %v1204 = vpack.c.b16 %v1028, %v1024
        %v1205 = vpack.c.b16 %v1033, %v1029
        %v1206 = vpack.c.b16 %v1034, %v1030
        %v1207 = vpack.c.b16 %v1035, %v1031
        %v1208 = vpack.c.b16 %v1036, %v1032
        %v1209 = vpack.c.b16 %v1041, %v1037
        %v1210 = vpack.c.b16 %v1042, %v1038
        %v1211 = vpack.c.b16 %v1043, %v1039
        %v1212 = vpack.c.b16 %v1044, %v1040
        %v1213 = vpack.c.b16 %v1049, %v1045
        %v1214 = vpack.c.b16 %v1050, %v1046
        %v1215 = vpack.c.b16 %v1051, %v1047
        %v1216 = vpack.c.b16 %v1052, %v1048
        %v1217 = vpack.c.b16 %v1057, %v1053
        %v1218 = vpack.c.b16 %v1058, %v1054
        %v1219 = vpack.c.b16 %v1059, %v1055
        %v1220 = vpack.c.b16 %v1060, %v1056
        %v1221 = vpack.c.b16 %v1065, %v1061
        %v1222 = vpack.c.b16 %v1066, %v1062
        %v1223 = vpack.c.b16 %v1067, %v1063
        %v1224 = vpack.c.b16 %v1068, %v1064
        %v1225 = vpack.c.b16 %v1073, %v1069
        %v1226 = vpack.c.b16 %v1074, %v1070
        %v1227 = vpack.c.b16 %v1075, %v1071
        %v1228 = vpack.c.b16 %v1076, %v1072
        %v1229 = vpack.c.b16 %v1081, %v1077
        %v1230 = vpack.c.b16 %v1082, %v1078
        %v1231 = vpack.c.b16 %v1083, %v1079
        %v1232 = vpack.c.b16 %v1084, %v1080
        %v1233 = vpack.c.b16 %v1089, %v1085
        %v1234 = vpack.c.b16 %v1090, %v1086
        %v1235 = vpack.c.b16 %v1091, %v1087
        %v1236 = vpack.c.b16 %v1092, %v1088
        %v1237 = vpack.c.b16 %v1097, %v1093
        %v1238 = vpack.c.b16 %v1098, %v1094
        %v1239 = vpack.c.b16 %v1099, %v1095
        %v1240 = vpack.c.b16 %v1100, %v1096
        %v1241 = vpack.c.b16 %v1105, %v1101
        %v1242 = vpack.c.b16 %v1106, %v1102
        %v1243 = vpack.c.b16 %v1107, %v1103
        %v1244 = vpack.c.b16 %v1108, %v1104
        %v1245 = vpack.c.b16 %v1113, %v1109
        %v1246 = vpack.c.b16 %v1114, %v1110
        %v1247 = vpack.c.b16 %v1115, %v1111
        %v1248 = vpack.c.b16 %v1116, %v1112
        %v1249 = vpack.c.b16 %v1121, %v1117
        %v1250 = vpack.c.b16 %v1122, %v1118
        %v1251 = vpack.c.b16 %v1123, %v1119
        %v1252 = vpack.c.b16 %v1124, %v1120
        %1381 = vmatprep.subr.bf16.mxu0 %v1126
        %1382 = vmatpush1.bf16.msra.mxu0 %v1125
        %1383 = vmatprep.subr.bf16.mxu0 %v1130
        %1384 = vmatpush1.bf16.msra.mxu0 %v1129
        %1385 = vmatprep.subr.bf16.mxu0 %v1134
        %1386 = vmatpush1.bf16.msra.mxu0 %v1133
        %1387 = vmatprep.subr.bf16.mxu0 %v1138
        %1388 = vmatpush1.bf16.msra.mxu0 %v1137
        %1389 = vmatprep.subr.bf16.mxu0 %v1142
        %1390 = vmatpush1.bf16.msra.mxu0 %v1141
        %1391 = vmatprep.subr.bf16.mxu0 %v1146
        %1392 = vmatpush1.bf16.msra.mxu0 %v1145
        %1393 = vmatprep.subr.bf16.mxu0 %v1150
        %1394 = vmatpush1.bf16.msra.mxu0 %v1149
        %1395 = vmatprep.subr.bf16.mxu0 %v1154
        %1396 = vmatpush1.bf16.msra.mxu0 %v1153
        %1397 = vmatprep.subr.bf16.mxu0 %v1158
        %1398 = vmatpush1.bf16.msra.mxu0 %v1157
        %1399 = vmatprep.subr.bf16.mxu0 %v1162
        %1400 = vmatpush1.bf16.msra.mxu0 %v1161
        %1401 = vmatprep.subr.bf16.mxu0 %v1166
        %1402 = vmatpush1.bf16.msra.mxu0 %v1165
        %1403 = vmatprep.subr.bf16.mxu0 %v1170
        %1404 = vmatpush1.bf16.msra.mxu0 %v1169
        %1405 = vmatprep.subr.bf16.mxu0 %v1174
        %1406 = vmatpush1.bf16.msra.mxu0 %v1173
        %1407 = vmatprep.subr.bf16.mxu0 %v1178
        %1408 = vmatpush1.bf16.msra.mxu0 %v1177
        %1409 = vmatprep.subr.bf16.mxu0 %v1182
        %1410 = vmatpush1.bf16.msra.mxu0 %v1181
        %1411 = vmatprep.subr.bf16.mxu0 %v1186
        %1412 = vmatpush1.bf16.msra.mxu0 %v1185
        %1413 = vmatprep.mubr.bf16.mxu0 %v584
        %1414 = vmatmul.mubr.bf16.gmra.mrb[0].mxu0 %v583
        %v1415 = vpop.f32.mrb[0].mxu0
        %v1416 = vadd.f32 %v724, %v1415
        %v1417 = vpop.f32.mrb[0].mxu0
        %v1418 = vadd.f32 %v728, %v1417
        %v1419 = vpop.f32.mrb[0].mxu0
        %v1420 = vadd.f32 %v724, %v1419
        %v1421 = vpop.f32.mrb[0].mxu0
        %v1422 = vadd.f32 %v728, %v1421
        %1423 = vmatprep.mubr.bf16.mxu0 %v588
        %1424 = vmatmul.mubr.bf16.gmra.mrb[0].mxu0 %v587
        %v1425 = vpop.f32.mrb[0].mxu0
        %v1426 = vadd.f32 %v724, %v1425
        %v1427 = vpop.f32.mrb[0].mxu0
        %v1428 = vadd.f32 %v728, %v1427
        %v1429 = vpop.f32.mrb[0].mxu0
        %v1430 = vadd.f32 %v724, %v1429
        %v1431 = vpop.f32.mrb[0].mxu0
        %v1432 = vadd.f32 %v728, %v1431
        %1433 = vdwg.mxu0
        %1434 = vmatprep.subr.bf16.mxu0 %v1190
        %1435 = vmatpush1.bf16.msra.mxu0 %v1189
        %1436 = vmatprep.subr.bf16.mxu0 %v1194
        %1437 = vmatpush1.bf16.msra.mxu0 %v1193
        %1438 = vmatprep.subr.bf16.mxu0 %v1198
        %1439 = vmatpush1.bf16.msra.mxu0 %v1197
        %1440 = vmatprep.subr.bf16.mxu0 %v1202
        %1441 = vmatpush1.bf16.msra.mxu0 %v1201
        %1442 = vmatprep.subr.bf16.mxu0 %v1206
        %1443 = vmatpush1.bf16.msra.mxu0 %v1205
        %1444 = vmatprep.subr.bf16.mxu0 %v1210
        %1445 = vmatpush1.bf16.msra.mxu0 %v1209
        %1446 = vmatprep.subr.bf16.mxu0 %v1214
        %1447 = vmatpush1.bf16.msra.mxu0 %v1213
        %1448 = vmatprep.subr.bf16.mxu0 %v1218
        %1449 = vmatpush1.bf16.msra.mxu0 %v1217
        %1450 = vmatprep.subr.bf16.mxu0 %v1222
        %1451 = vmatpush1.bf16.msra.mxu0 %v1221
        %1452 = vmatprep.subr.bf16.mxu0 %v1226
        %1453 = vmatpush1.bf16.msra.mxu0 %v1225
        %1454 = vmatprep.subr.bf16.mxu0 %v1230
        %1455 = vmatpush1.bf16.msra.mxu0 %v1229
        %1456 = vmatprep.subr.bf16.mxu0 %v1234
        %1457 = vmatpush1.bf16.msra.mxu0 %v1233
        %1458 = vmatprep.subr.bf16.mxu0 %v1238
        %1459 = vmatpush1.bf16.msra.mxu0 %v1237
        %1460 = vmatprep.subr.bf16.mxu0 %v1242
        %1461 = vmatpush1.bf16.msra.mxu0 %v1241
        %1462 = vmatprep.subr.bf16.mxu0 %v1246
        %1463 = vmatpush1.bf16.msra.mxu0 %v1245
        %1464 = vmatprep.subr.bf16.mxu0 %v1250
        %1465 = vmatpush1.bf16.msra.mxu0 %v1249
        %1466 = vmatprep.mubr.bf16.mxu0 %v586
        %1467 = vmatmul.mubr.bf16.gmra.mrb[0].mxu0 %v585
        %v1468 = vpop.f32.mrb[0].mxu0
        %v1469 = vadd.f32 %v1416, %v1468
        %v1470 = vpop.f32.mrb[0].mxu0
        %v1471 = vadd.f32 %v1418, %v1470
        %v1472 = vpop.f32.mrb[0].mxu0
        %v1473 = vadd.f32 %v1420, %v1472
        %v1474 = vpop.f32.mrb[0].mxu0
        %v1475 = vadd.f32 %v1422, %v1474
        %1476 = vmatprep.mubr.bf16.mxu0 %v590
        %1477 = vmatmul.mubr.bf16.gmra.mrb[0].mxu0 %v589
        %v1478 = vpop.f32.mrb[0].mxu0
        %v1479 = vadd.f32 %v1426, %v1478
        %v1480 = vpop.f32.mrb[0].mxu0
        %v1481 = vadd.f32 %v1428, %v1480
        %v1482 = vpop.f32.mrb[0].mxu0
        %v1483 = vadd.f32 %v1430, %v1482
        %v1484 = vpop.f32.mrb[0].mxu0
        %v1485 = vadd.f32 %v1432, %v1484
        %1486 = vdwg.mxu0
        %1487 = vmatprep.subr.bf16.mxu0 %v1128
        %1488 = vmatpush1.bf16.msra.mxu0 %v1127
        %1489 = vmatprep.subr.bf16.mxu0 %v1132
        %1490 = vmatpush1.bf16.msra.mxu0 %v1131
        %1491 = vmatprep.subr.bf16.mxu0 %v1136
        %1492 = vmatpush1.bf16.msra.mxu0 %v1135
        %1493 = vmatprep.subr.bf16.mxu0 %v1140
        %1494 = vmatpush1.bf16.msra.mxu0 %v1139
        %1495 = vmatprep.subr.bf16.mxu0 %v1144
        %1496 = vmatpush1.bf16.msra.mxu0 %v1143
        %1497 = vmatprep.subr.bf16.mxu0 %v1148
        %1498 = vmatpush1.bf16.msra.mxu0 %v1147
        %1499 = vmatprep.subr.bf16.mxu0 %v1152
        %1500 = vmatpush1.bf16.msra.mxu0 %v1151
        %1501 = vmatprep.subr.bf16.mxu0 %v1156
        %1502 = vmatpush1.bf16.msra.mxu0 %v1155
        %1503 = vmatprep.subr.bf16.mxu0 %v1160
        %1504 = vmatpush1.bf16.msra.mxu0 %v1159
        %1505 = vmatprep.subr.bf16.mxu0 %v1164
        %1506 = vmatpush1.bf16.msra.mxu0 %v1163
        %1507 = vmatprep.subr.bf16.mxu0 %v1168
        %1508 = vmatpush1.bf16.msra.mxu0 %v1167
        %1509 = vmatprep.subr.bf16.mxu0 %v1172
        %1510 = vmatpush1.bf16.msra.mxu0 %v1171
        %1511 = vmatprep.subr.bf16.mxu0 %v1176
        %1512 = vmatpush1.bf16.msra.mxu0 %v1175
        %1513 = vmatprep.subr.bf16.mxu0 %v1180
        %1514 = vmatpush1.bf16.msra.mxu0 %v1179
        %1515 = vmatprep.subr.bf16.mxu0 %v1184
        %1516 = vmatpush1.bf16.msra.mxu0 %v1183
        %1517 = vmatprep.subr.bf16.mxu0 %v1188
        %1518 = vmatpush1.bf16.msra.mxu0 %v1187
        %1519 = vmatprep.mubr.bf16.mxu0 %v584
        %1520 = vmatmul.mubr.bf16.gmra.mrb[0].mxu0 %v583
        %v1521 = vpop.f32.mrb[0].mxu0
        %v1522 = vadd.f32 %v732, %v1521
        %v1523 = vpop.f32.mrb[0].mxu0
        %v1524 = vadd.f32 %v736, %v1523
        %v1525 = vpop.f32.mrb[0].mxu0
        %v1526 = vadd.f32 %v732, %v1525
        %v1527 = vpop.f32.mrb[0].mxu0
        %v1528 = vadd.f32 %v736, %v1527
        %1529 = vmatprep.mubr.bf16.mxu0 %v588
        %1530 = vmatmul.mubr.bf16.gmra.mrb[0].mxu0 %v587
        %v1531 = vpop.f32.mrb[0].mxu0
        %v1532 = vadd.f32 %v732, %v1531
        %v1533 = vpop.f32.mrb[0].mxu0
        %v1534 = vadd.f32 %v736, %v1533
        %v1535 = vpop.f32.mrb[0].mxu0
        %v1536 = vadd.f32 %v732, %v1535
        %v1537 = vpop.f32.mrb[0].mxu0
        %v1538 = vadd.f32 %v736, %v1537
        %1539 = vdwg.mxu0
        %1540 = vmatprep.subr.bf16.mxu0 %v1192
        %1541 = vmatpush1.bf16.msra.mxu0 %v1191
        %1542 = vmatprep.subr.bf16.mxu0 %v1196
        %1543 = vmatpush1.bf16.msra.mxu0 %v1195
        %1544 = vmatprep.subr.bf16.mxu0 %v1200
        %1545 = vmatpush1.bf16.msra.mxu0 %v1199
        %1546 = vmatprep.subr.bf16.mxu0 %v1204
        %1547 = vmatpush1.bf16.msra.mxu0 %v1203
        %1548 = vmatprep.subr.bf16.mxu0 %v1208
        %1549 = vmatpush1.bf16.msra.mxu0 %v1207
        %1550 = vmatprep.subr.bf16.mxu0 %v1212
        %1551 = vmatpush1.bf16.msra.mxu0 %v1211
        %1552 = vmatprep.subr.bf16.mxu0 %v1216
        %1553 = vmatpush1.bf16.msra.mxu0 %v1215
        %1554 = vmatprep.subr.bf16.mxu0 %v1220
        %1555 = vmatpush1.bf16.msra.mxu0 %v1219
        %1556 = vmatprep.subr.bf16.mxu0 %v1224
        %1557 = vmatpush1.bf16.msra.mxu0 %v1223
        %1558 = vmatprep.subr.bf16.mxu0 %v1228
        %1559 = vmatpush1.bf16.msra.mxu0 %v1227
        %1560 = vmatprep.subr.bf16.mxu0 %v1232
        %1561 = vmatpush1.bf16.msra.mxu0 %v1231
        %1562 = vmatprep.subr.bf16.mxu0 %v1236
        %1563 = vmatpush1.bf16.msra.mxu0 %v1235
        %1564 = vmatprep.subr.bf16.mxu0 %v1240
        %1565 = vmatpush1.bf16.msra.mxu0 %v1239
        %1566 = vmatprep.subr.bf16.mxu0 %v1244
        %1567 = vmatpush1.bf16.msra.mxu0 %v1243
        %1568 = vmatprep.subr.bf16.mxu0 %v1248
        %1569 = vmatpush1.bf16.msra.mxu0 %v1247
        %1570 = vmatprep.subr.bf16.mxu0 %v1252
        %1571 = vmatpush1.bf16.msra.mxu0 %v1251
        %1572 = vmatprep.mubr.bf16.mxu0 %v586
        %1573 = vmatmul.mubr.bf16.gmra.mrb[0].mxu0 %v585
        %v1574 = vpop.f32.mrb[0].mxu0
        %v1575 = vadd.f32 %v1522, %v1574
        %v1576 = vpop.f32.mrb[0].mxu0
        %v1577 = vadd.f32 %v1524, %v1576
        %v1578 = vpop.f32.mrb[0].mxu0
        %v1579 = vadd.f32 %v1526, %v1578
        %v1580 = vpop.f32.mrb[0].mxu0
        %v1581 = vadd.f32 %v1528, %v1580
        %1582 = vmatprep.mubr.bf16.mxu0 %v590
        %1583 = vmatmul.mubr.bf16.gmra.mrb[0].mxu0 %v589
        %v1584 = vpop.f32.mrb[0].mxu0
        %v1585 = vadd.f32 %v1532, %v1584
        %v1586 = vpop.f32.mrb[0].mxu0
        %v1587 = vadd.f32 %v1534, %v1586
        %v1588 = vpop.f32.mrb[0].mxu0
        %v1589 = vadd.f32 %v1536, %v1588
        %v1590 = vpop.f32.mrb[0].mxu0
        %v1591 = vadd.f32 %v1538, %v1590
        %1592 = vdwg.mxu0
        %v1593 = vmax.f32 %v1469, 0.0
        %v1594 = vmax.f32 %v1471, 0.0
        %v1595 = vmax.f32 %v1575, 0.0
        %v1596 = vmax.f32 %v1577, 0.0
        %v1597 = vmax.f32 %v1473, 0.0
        %v1598 = vmax.f32 %v1475, 0.0
        %v1599 = vmax.f32 %v1579, 0.0
        %v1600 = vmax.f32 %v1581, 0.0
        %v1601 = vmax.f32 %v1479, 0.0
        %v1602 = vmax.f32 %v1481, 0.0
        %v1603 = vmax.f32 %v1585, 0.0
        %v1604 = vmax.f32 %v1587, 0.0
        %v1605 = vmax.f32 %v1483, 0.0
        %v1606 = vmax.f32 %v1485, 0.0
        %v1607 = vmax.f32 %v1589, 0.0
        %v1608 = vmax.f32 %v1591, 0.0
        %v1609 = vpack.c.bf16 %v1597, %v1593
        %v1610 = vpack.c.bf16 %v1598, %v1594
        %v1611 = vpack.c.bf16 %v1599, %v1595
        %v1612 = vpack.c.bf16 %v1600, %v1596
        %v1613 = vpack.c.bf16 %v1605, %v1601
        %v1614 = vpack.c.bf16 %v1606, %v1602
        %v1615 = vpack.c.bf16 %v1607, %v1603
        %v1616 = vpack.c.bf16 %v1608, %v1604
        %v1617 = vld [vmem:[#allocation5] sm:$0xff]
        %v1618 = vld [vmem:[#allocation5 + $0x8] sm:$0xff]
        %v1619 = vld [vmem:[#allocation5 + $0x10] sm:$0xff]
        %v1620 = vld [vmem:[#allocation5 + $0x18] sm:$0xff]
        %v1621 = vld [vmem:[#allocation5 + $0x20] sm:$0xff]
        %v1622 = vld [vmem:[#allocation5 + $0x28] sm:$0xff]
        %v1623 = vld [vmem:[#allocation5 + $0x30] sm:$0xff]
        %v1624 = vld [vmem:[#allocation5 + $0x38] sm:$0xff]
        %v1625 = vld [vmem:[#allocation5 + $0x40] sm:$0xff]
        %v1626 = vld [vmem:[#allocation5 + $0x48] sm:$0xff]
        %v1627 = vld [vmem:[#allocation5 + $0x50] sm:$0xff]
        %v1628 = vld [vmem:[#allocation5 + $0x58] sm:$0xff]
        %v1629 = vld [vmem:[#allocation5 + $0x60] sm:$0xff]
        %v1630 = vld [vmem:[#allocation5 + $0x68] sm:$0xff]
        %v1631 = vld [vmem:[#allocation5 + $0x70] sm:$0xff]
        %v1632 = vld [vmem:[#allocation5 + $0x78] sm:$0xff]
        %v1633 = vld [vmem:[#allocation5 + $0x80] sm:$0xff]
        %v1634 = vld [vmem:[#allocation5 + $0x88] sm:$0xff]
        %v1635 = vld [vmem:[#allocation5 + $0x90] sm:$0xff]
        %v1636 = vld [vmem:[#allocation5 + $0x98] sm:$0xff]
        %v1637 = vld [vmem:[#allocation5 + $0xa0] sm:$0xff]
        %v1638 = vld [vmem:[#allocation5 + $0xa8] sm:$0xff]
        %v1639 = vld [vmem:[#allocation5 + $0xb0] sm:$0xff]
        %v1640 = vld [vmem:[#allocation5 + $0xb8] sm:$0xff]
        %v1641 = vld [vmem:[#allocation5 + $0xc0] sm:$0xff]
        %v1642 = vld [vmem:[#allocation5 + $0xc8] sm:$0xff]
        %v1643 = vld [vmem:[#allocation5 + $0xd0] sm:$0xff]
        %v1644 = vld [vmem:[#allocation5 + $0xd8] sm:$0xff]
        %v1645 = vld [vmem:[#allocation5 + $0xe0] sm:$0xff]
        %v1646 = vld [vmem:[#allocation5 + $0xe8] sm:$0xff]
        %v1647 = vld [vmem:[#allocation5 + $0xf0] sm:$0xff]
        %v1648 = vld [vmem:[#allocation5 + $0xf8] sm:$0xff]
        %v1649 = vld [vmem:[#allocation5 + $0x100] sm:$0xff]
        %v1650 = vld [vmem:[#allocation5 + $0x108] sm:$0xff]
        %v1651 = vld [vmem:[#allocation5 + $0x110] sm:$0xff]
        %v1652 = vld [vmem:[#allocation5 + $0x118] sm:$0xff]
        %v1653 = vld [vmem:[#allocation5 + $0x120] sm:$0xff]
        %v1654 = vld [vmem:[#allocation5 + $0x128] sm:$0xff]
        %v1655 = vld [vmem:[#allocation5 + $0x130] sm:$0xff]
        %v1656 = vld [vmem:[#allocation5 + $0x138] sm:$0xff]
        %v1657 = vld [vmem:[#allocation5 + $0x140] sm:$0xff]
        %v1658 = vld [vmem:[#allocation5 + $0x148] sm:$0xff]
        %v1659 = vld [vmem:[#allocation5 + $0x150] sm:$0xff]
        %v1660 = vld [vmem:[#allocation5 + $0x158] sm:$0xff]
        %v1661 = vld [vmem:[#allocation5 + $0x160] sm:$0xff]
        %v1662 = vld [vmem:[#allocation5 + $0x168] sm:$0xff]
        %v1663 = vld [vmem:[#allocation5 + $0x170] sm:$0xff]
        %v1664 = vld [vmem:[#allocation5 + $0x178] sm:$0xff]
        %v1665 = vld [vmem:[#allocation5 + $0x180] sm:$0xff]
        %v1666 = vld [vmem:[#allocation5 + $0x188] sm:$0xff]
        %v1667 = vld [vmem:[#allocation5 + $0x190] sm:$0xff]
        %v1668 = vld [vmem:[#allocation5 + $0x198] sm:$0xff]
        %v1669 = vld [vmem:[#allocation5 + $0x1a0] sm:$0xff]
        %v1670 = vld [vmem:[#allocation5 + $0x1a8] sm:$0xff]
        %v1671 = vld [vmem:[#allocation5 + $0x1b0] sm:$0xff]
        %v1672 = vld [vmem:[#allocation5 + $0x1b8] sm:$0xff]
        %v1673 = vld [vmem:[#allocation5 + $0x1c0] sm:$0xff]
        %v1674 = vld [vmem:[#allocation5 + $0x1c8] sm:$0xff]
        %v1675 = vld [vmem:[#allocation5 + $0x1d0] sm:$0xff]
        %v1676 = vld [vmem:[#allocation5 + $0x1d8] sm:$0xff]
        %v1677 = vld [vmem:[#allocation5 + $0x1e0] sm:$0xff]
        %v1678 = vld [vmem:[#allocation5 + $0x1e8] sm:$0xff]
        %v1679 = vld [vmem:[#allocation5 + $0x1f0] sm:$0xff]
        %v1680 = vld [vmem:[#allocation5 + $0x1f8] sm:$0xff]
        %v1681 = vld [vmem:[#allocation5 + $0x200] sm:$0xff]
        %v1682 = vld [vmem:[#allocation5 + $0x208] sm:$0xff]
        %v1683 = vld [vmem:[#allocation5 + $0x210] sm:$0xff]
        %v1684 = vld [vmem:[#allocation5 + $0x218] sm:$0xff]
        %v1685 = vld [vmem:[#allocation5 + $0x220] sm:$0xff]
        %v1686 = vld [vmem:[#allocation5 + $0x228] sm:$0xff]
        %v1687 = vld [vmem:[#allocation5 + $0x230] sm:$0xff]
        %v1688 = vld [vmem:[#allocation5 + $0x238] sm:$0xff]
        %v1689 = vld [vmem:[#allocation5 + $0x240] sm:$0xff]
        %v1690 = vld [vmem:[#allocation5 + $0x248] sm:$0xff]
        %v1691 = vld [vmem:[#allocation5 + $0x250] sm:$0xff]
        %v1692 = vld [vmem:[#allocation5 + $0x258] sm:$0xff]
        %v1693 = vld [vmem:[#allocation5 + $0x260] sm:$0xff]
        %v1694 = vld [vmem:[#allocation5 + $0x268] sm:$0xff]
        %v1695 = vld [vmem:[#allocation5 + $0x270] sm:$0xff]
        %v1696 = vld [vmem:[#allocation5 + $0x278] sm:$0xff]
        %v1697 = vld [vmem:[#allocation5 + $0x280] sm:$0xff]
        %v1698 = vld [vmem:[#allocation5 + $0x288] sm:$0xff]
        %v1699 = vld [vmem:[#allocation5 + $0x290] sm:$0xff]
        %v1700 = vld [vmem:[#allocation5 + $0x298] sm:$0xff]
        %v1701 = vld [vmem:[#allocation5 + $0x2a0] sm:$0xff]
        %v1702 = vld [vmem:[#allocation5 + $0x2a8] sm:$0xff]
        %v1703 = vld [vmem:[#allocation5 + $0x2b0] sm:$0xff]
        %v1704 = vld [vmem:[#allocation5 + $0x2b8] sm:$0xff]
        %v1705 = vld [vmem:[#allocation5 + $0x2c0] sm:$0xff]
        %v1706 = vld [vmem:[#allocation5 + $0x2c8] sm:$0xff]
        %v1707 = vld [vmem:[#allocation5 + $0x2d0] sm:$0xff]
        %v1708 = vld [vmem:[#allocation5 + $0x2d8] sm:$0xff]
        %v1709 = vld [vmem:[#allocation5 + $0x2e0] sm:$0xff]
        %v1710 = vld [vmem:[#allocation5 + $0x2e8] sm:$0xff]
        %v1711 = vld [vmem:[#allocation5 + $0x2f0] sm:$0xff]
        %v1712 = vld [vmem:[#allocation5 + $0x2f8] sm:$0xff]
        %v1713 = vld [vmem:[#allocation5 + $0x300] sm:$0xff]
        %v1714 = vld [vmem:[#allocation5 + $0x308] sm:$0xff]
        %v1715 = vld [vmem:[#allocation5 + $0x310] sm:$0xff]
        %v1716 = vld [vmem:[#allocation5 + $0x318] sm:$0xff]
        %v1717 = vld [vmem:[#allocation5 + $0x320] sm:$0xff]
        %v1718 = vld [vmem:[#allocation5 + $0x328] sm:$0xff]
        %v1719 = vld [vmem:[#allocation5 + $0x330] sm:$0xff]
        %v1720 = vld [vmem:[#allocation5 + $0x338] sm:$0xff]
        %v1721 = vld [vmem:[#allocation5 + $0x340] sm:$0xff]
        %v1722 = vld [vmem:[#allocation5 + $0x348] sm:$0xff]
        %v1723 = vld [vmem:[#allocation5 + $0x350] sm:$0xff]
        %v1724 = vld [vmem:[#allocation5 + $0x358] sm:$0xff]
        %v1725 = vld [vmem:[#allocation5 + $0x360] sm:$0xff]
        %v1726 = vld [vmem:[#allocation5 + $0x368] sm:$0xff]
        %v1727 = vld [vmem:[#allocation5 + $0x370] sm:$0xff]
        %v1728 = vld [vmem:[#allocation5 + $0x378] sm:$0xff]
        %v1729 = vld [vmem:[#allocation5 + $0x380] sm:$0xff]
        %v1730 = vld [vmem:[#allocation5 + $0x388] sm:$0xff]
        %v1731 = vld [vmem:[#allocation5 + $0x390] sm:$0xff]
        %v1732 = vld [vmem:[#allocation5 + $0x398] sm:$0xff]
        %v1733 = vld [vmem:[#allocation5 + $0x3a0] sm:$0xff]
        %v1734 = vld [vmem:[#allocation5 + $0x3a8] sm:$0xff]
        %v1735 = vld [vmem:[#allocation5 + $0x3b0] sm:$0xff]
        %v1736 = vld [vmem:[#allocation5 + $0x3b8] sm:$0xff]
        %v1737 = vld [vmem:[#allocation5 + $0x3c0] sm:$0xff]
        %v1738 = vld [vmem:[#allocation5 + $0x3c8] sm:$0xff]
        %v1739 = vld [vmem:[#allocation5 + $0x3d0] sm:$0xff]
        %v1740 = vld [vmem:[#allocation5 + $0x3d8] sm:$0xff]
        %v1741 = vld [vmem:[#allocation5 + $0x3e0] sm:$0xff]
        %v1742 = vld [vmem:[#allocation5 + $0x3e8] sm:$0xff]
        %v1743 = vld [vmem:[#allocation5 + $0x3f0] sm:$0xff]
        %v1744 = vld [vmem:[#allocation5 + $0x3f8] sm:$0xff]
        %v1745 = vld [vmem:[%s6] sm:$0xf]
        %v1747 = vlaneseq
        %v1748 = vshrl.u32 %v1747, 7
        %v1749 = vsub.s32 0, %v1748
        %v1750 = vrot.slane %v1745, %v1749
        %v1751 = vlaneseq
        %v1752 = vshrl.u32 %v1751, 7
        %v1753 = vsub.s32 1, %v1752
        %v1754 = vrot.slane %v1745, %v1753
        %v1755 = vlaneseq
        %v1756 = vshrl.u32 %v1755, 7
        %v1757 = vsub.s32 2, %v1756
        %v1758 = vrot.slane %v1745, %v1757
        %v1759 = vlaneseq
        %v1760 = vshrl.u32 %v1759, 7
        %v1761 = vsub.s32 3, %v1760
        %v1762 = vrot.slane %v1745, %v1761
        %v1895 = vunpack.c.l.b16 %v1617
        %v1896 = vunpack.c.h.b16 %v1617
        %v1897 = vunpack.c.l.b16 %v1618
        %v1898 = vunpack.c.h.b16 %v1618
        %v1899 = vunpack.c.l.b16 %v1619
        %v1900 = vunpack.c.h.b16 %v1619
        %v1901 = vunpack.c.l.b16 %v1620
        %v1902 = vunpack.c.h.b16 %v1620
        %v1903 = vunpack.c.l.b16 %v1621
        %v1904 = vunpack.c.h.b16 %v1621
        %v1905 = vunpack.c.l.b16 %v1622
        %v1906 = vunpack.c.h.b16 %v1622
        %v1907 = vunpack.c.l.b16 %v1623
        %v1908 = vunpack.c.h.b16 %v1623
        %v1909 = vunpack.c.l.b16 %v1624
        %v1910 = vunpack.c.h.b16 %v1624
        %v1911 = vunpack.c.l.b16 %v1625
        %v1912 = vunpack.c.h.b16 %v1625
        %v1913 = vunpack.c.l.b16 %v1626
        %v1914 = vunpack.c.h.b16 %v1626
        %v1915 = vunpack.c.l.b16 %v1627
        %v1916 = vunpack.c.h.b16 %v1627
        %v1917 = vunpack.c.l.b16 %v1628
        %v1918 = vunpack.c.h.b16 %v1628
        %v1919 = vunpack.c.l.b16 %v1629
        %v1920 = vunpack.c.h.b16 %v1629
        %v1921 = vunpack.c.l.b16 %v1630
        %v1922 = vunpack.c.h.b16 %v1630
        %v1923 = vunpack.c.l.b16 %v1631
        %v1924 = vunpack.c.h.b16 %v1631
        %v1925 = vunpack.c.l.b16 %v1632
        %v1926 = vunpack.c.h.b16 %v1632
        %v1927 = vunpack.c.l.b16 %v1633
        %v1928 = vunpack.c.h.b16 %v1633
        %v1929 = vunpack.c.l.b16 %v1634
        %v1930 = vunpack.c.h.b16 %v1634
        %v1931 = vunpack.c.l.b16 %v1635
        %v1932 = vunpack.c.h.b16 %v1635
        %v1933 = vunpack.c.l.b16 %v1636
        %v1934 = vunpack.c.h.b16 %v1636
        %v1935 = vunpack.c.l.b16 %v1637
        %v1936 = vunpack.c.h.b16 %v1637
        %v1937 = vunpack.c.l.b16 %v1638
        %v1938 = vunpack.c.h.b16 %v1638
        %v1939 = vunpack.c.l.b16 %v1639
        %v1940 = vunpack.c.h.b16 %v1639
        %v1941 = vunpack.c.l.b16 %v1640
        %v1942 = vunpack.c.h.b16 %v1640
        %v1943 = vunpack.c.l.b16 %v1641
        %v1944 = vunpack.c.h.b16 %v1641
        %v1945 = vunpack.c.l.b16 %v1642
        %v1946 = vunpack.c.h.b16 %v1642
        %v1947 = vunpack.c.l.b16 %v1643
        %v1948 = vunpack.c.h.b16 %v1643
        %v1949 = vunpack.c.l.b16 %v1644
        %v1950 = vunpack.c.h.b16 %v1644
        %v1951 = vunpack.c.l.b16 %v1645
        %v1952 = vunpack.c.h.b16 %v1645
        %v1953 = vunpack.c.l.b16 %v1646
        %v1954 = vunpack.c.h.b16 %v1646
        %v1955 = vunpack.c.l.b16 %v1647
        %v1956 = vunpack.c.h.b16 %v1647
        %v1957 = vunpack.c.l.b16 %v1648
        %v1958 = vunpack.c.h.b16 %v1648
        %v1959 = vunpack.c.l.b16 %v1649
        %v1960 = vunpack.c.h.b16 %v1649
        %v1961 = vunpack.c.l.b16 %v1650
        %v1962 = vunpack.c.h.b16 %v1650
        %v1963 = vunpack.c.l.b16 %v1651
        %v1964 = vunpack.c.h.b16 %v1651
        %v1965 = vunpack.c.l.b16 %v1652
        %v1966 = vunpack.c.h.b16 %v1652
        %v1967 = vunpack.c.l.b16 %v1653
        %v1968 = vunpack.c.h.b16 %v1653
        %v1969 = vunpack.c.l.b16 %v1654
        %v1970 = vunpack.c.h.b16 %v1654
        %v1971 = vunpack.c.l.b16 %v1655
        %v1972 = vunpack.c.h.b16 %v1655
        %v1973 = vunpack.c.l.b16 %v1656
        %v1974 = vunpack.c.h.b16 %v1656
        %v1975 = vunpack.c.l.b16 %v1657
        %v1976 = vunpack.c.h.b16 %v1657
        %v1977 = vunpack.c.l.b16 %v1658
        %v1978 = vunpack.c.h.b16 %v1658
        %v1979 = vunpack.c.l.b16 %v1659
        %v1980 = vunpack.c.h.b16 %v1659
        %v1981 = vunpack.c.l.b16 %v1660
        %v1982 = vunpack.c.h.b16 %v1660
        %v1983 = vunpack.c.l.b16 %v1661
        %v1984 = vunpack.c.h.b16 %v1661
        %v1985 = vunpack.c.l.b16 %v1662
        %v1986 = vunpack.c.h.b16 %v1662
        %v1987 = vunpack.c.l.b16 %v1663
        %v1988 = vunpack.c.h.b16 %v1663
        %v1989 = vunpack.c.l.b16 %v1664
        %v1990 = vunpack.c.h.b16 %v1664
        %v1991 = vunpack.c.l.b16 %v1665
        %v1992 = vunpack.c.h.b16 %v1665
        %v1993 = vunpack.c.l.b16 %v1666
        %v1994 = vunpack.c.h.b16 %v1666
        %v1995 = vunpack.c.l.b16 %v1667
        %v1996 = vunpack.c.h.b16 %v1667
        %v1997 = vunpack.c.l.b16 %v1668
        %v1998 = vunpack.c.h.b16 %v1668
        %v1999 = vunpack.c.l.b16 %v1669
        %v2000 = vunpack.c.h.b16 %v1669
        %v2001 = vunpack.c.l.b16 %v1670
        %v2002 = vunpack.c.h.b16 %v1670
        %v2003 = vunpack.c.l.b16 %v1671
        %v2004 = vunpack.c.h.b16 %v1671
        %v2005 = vunpack.c.l.b16 %v1672
        %v2006 = vunpack.c.h.b16 %v1672
        %v2007 = vunpack.c.l.b16 %v1673
        %v2008 = vunpack.c.h.b16 %v1673
        %v2009 = vunpack.c.l.b16 %v1674
        %v2010 = vunpack.c.h.b16 %v1674
        %v2011 = vunpack.c.l.b16 %v1675
        %v2012 = vunpack.c.h.b16 %v1675
        %v2013 = vunpack.c.l.b16 %v1676
        %v2014 = vunpack.c.h.b16 %v1676
        %v2015 = vunpack.c.l.b16 %v1677
        %v2016 = vunpack.c.h.b16 %v1677
        %v2017 = vunpack.c.l.b16 %v1678
        %v2018 = vunpack.c.h.b16 %v1678
        %v2019 = vunpack.c.l.b16 %v1679
        %v2020 = vunpack.c.h.b16 %v1679
        %v2021 = vunpack.c.l.b16 %v1680
        %v2022 = vunpack.c.h.b16 %v1680
        %v2023 = vunpack.c.l.b16 %v1681
        %v2024 = vunpack.c.h.b16 %v1681
        %v2025 = vunpack.c.l.b16 %v1682
        %v2026 = vunpack.c.h.b16 %v1682
        %v2027 = vunpack.c.l.b16 %v1683
        %v2028 = vunpack.c.h.b16 %v1683
        %v2029 = vunpack.c.l.b16 %v1684
        %v2030 = vunpack.c.h.b16 %v1684
        %v2031 = vunpack.c.l.b16 %v1685
        %v2032 = vunpack.c.h.b16 %v1685
        %v2033 = vunpack.c.l.b16 %v1686
        %v2034 = vunpack.c.h.b16 %v1686
        %v2035 = vunpack.c.l.b16 %v1687
        %v2036 = vunpack.c.h.b16 %v1687
        %v2037 = vunpack.c.l.b16 %v1688
        %v2038 = vunpack.c.h.b16 %v1688
        %v2039 = vunpack.c.l.b16 %v1689
        %v2040 = vunpack.c.h.b16 %v1689
        %v2041 = vunpack.c.l.b16 %v1690
        %v2042 = vunpack.c.h.b16 %v1690
        %v2043 = vunpack.c.l.b16 %v1691
        %v2044 = vunpack.c.h.b16 %v1691
        %v2045 = vunpack.c.l.b16 %v1692
        %v2046 = vunpack.c.h.b16 %v1692
        %v2047 = vunpack.c.l.b16 %v1693
        %v2048 = vunpack.c.h.b16 %v1693
        %v2049 = vunpack.c.l.b16 %v1694
        %v2050 = vunpack.c.h.b16 %v1694
        %v2051 = vunpack.c.l.b16 %v1695
        %v2052 = vunpack.c.h.b16 %v1695
        %v2053 = vunpack.c.l.b16 %v1696
        %v2054 = vunpack.c.h.b16 %v1696
        %v2055 = vunpack.c.l.b16 %v1697
        %v2056 = vunpack.c.h.b16 %v1697
        %v2057 = vunpack.c.l.b16 %v1698
        %v2058 = vunpack.c.h.b16 %v1698
        %v2059 = vunpack.c.l.b16 %v1699
        %v2060 = vunpack.c.h.b16 %v1699
        %v2061 = vunpack.c.l.b16 %v1700
        %v2062 = vunpack.c.h.b16 %v1700
        %v2063 = vunpack.c.l.b16 %v1701
        %v2064 = vunpack.c.h.b16 %v1701
        %v2065 = vunpack.c.l.b16 %v1702
        %v2066 = vunpack.c.h.b16 %v1702
        %v2067 = vunpack.c.l.b16 %v1703
        %v2068 = vunpack.c.h.b16 %v1703
        %v2069 = vunpack.c.l.b16 %v1704
        %v2070 = vunpack.c.h.b16 %v1704
        %v2071 = vunpack.c.l.b16 %v1705
        %v2072 = vunpack.c.h.b16 %v1705
        %v2073 = vunpack.c.l.b16 %v1706
        %v2074 = vunpack.c.h.b16 %v1706
        %v2075 = vunpack.c.l.b16 %v1707
        %v2076 = vunpack.c.h.b16 %v1707
        %v2077 = vunpack.c.l.b16 %v1708
        %v2078 = vunpack.c.h.b16 %v1708
        %v2079 = vunpack.c.l.b16 %v1709
        %v2080 = vunpack.c.h.b16 %v1709
        %v2081 = vunpack.c.l.b16 %v1710
        %v2082 = vunpack.c.h.b16 %v1710
        %v2083 = vunpack.c.l.b16 %v1711
        %v2084 = vunpack.c.h.b16 %v1711
        %v2085 = vunpack.c.l.b16 %v1712
        %v2086 = vunpack.c.h.b16 %v1712
        %v2087 = vunpack.c.l.b16 %v1713
        %v2088 = vunpack.c.h.b16 %v1713
        %v2089 = vunpack.c.l.b16 %v1714
        %v2090 = vunpack.c.h.b16 %v1714
        %v2091 = vunpack.c.l.b16 %v1715
        %v2092 = vunpack.c.h.b16 %v1715
        %v2093 = vunpack.c.l.b16 %v1716
        %v2094 = vunpack.c.h.b16 %v1716
        %v2095 = vunpack.c.l.b16 %v1717
        %v2096 = vunpack.c.h.b16 %v1717
        %v2097 = vunpack.c.l.b16 %v1718
        %v2098 = vunpack.c.h.b16 %v1718
        %v2099 = vunpack.c.l.b16 %v1719
        %v2100 = vunpack.c.h.b16 %v1719
        %v2101 = vunpack.c.l.b16 %v1720
        %v2102 = vunpack.c.h.b16 %v1720
        %v2103 = vunpack.c.l.b16 %v1721
        %v2104 = vunpack.c.h.b16 %v1721
        %v2105 = vunpack.c.l.b16 %v1722
        %v2106 = vunpack.c.h.b16 %v1722
        %v2107 = vunpack.c.l.b16 %v1723
        %v2108 = vunpack.c.h.b16 %v1723
        %v2109 = vunpack.c.l.b16 %v1724
        %v2110 = vunpack.c.h.b16 %v1724
        %v2111 = vunpack.c.l.b16 %v1725
        %v2112 = vunpack.c.h.b16 %v1725
        %v2113 = vunpack.c.l.b16 %v1726
        %v2114 = vunpack.c.h.b16 %v1726
        %v2115 = vunpack.c.l.b16 %v1727
        %v2116 = vunpack.c.h.b16 %v1727
        %v2117 = vunpack.c.l.b16 %v1728
        %v2118 = vunpack.c.h.b16 %v1728
        %v2119 = vunpack.c.l.b16 %v1729
        %v2120 = vunpack.c.h.b16 %v1729
        %v2121 = vunpack.c.l.b16 %v1730
        %v2122 = vunpack.c.h.b16 %v1730
        %v2123 = vunpack.c.l.b16 %v1731
        %v2124 = vunpack.c.h.b16 %v1731
        %v2125 = vunpack.c.l.b16 %v1732
        %v2126 = vunpack.c.h.b16 %v1732
        %v2127 = vunpack.c.l.b16 %v1733
        %v2128 = vunpack.c.h.b16 %v1733
        %v2129 = vunpack.c.l.b16 %v1734
        %v2130 = vunpack.c.h.b16 %v1734
        %v2131 = vunpack.c.l.b16 %v1735
        %v2132 = vunpack.c.h.b16 %v1735
        %v2133 = vunpack.c.l.b16 %v1736
        %v2134 = vunpack.c.h.b16 %v1736
        %v2135 = vunpack.c.l.b16 %v1737
        %v2136 = vunpack.c.h.b16 %v1737
        %v2137 = vunpack.c.l.b16 %v1738
        %v2138 = vunpack.c.h.b16 %v1738
        %v2139 = vunpack.c.l.b16 %v1739
        %v2140 = vunpack.c.h.b16 %v1739
        %v2141 = vunpack.c.l.b16 %v1740
        %v2142 = vunpack.c.h.b16 %v1740
        %v2143 = vunpack.c.l.b16 %v1741
        %v2144 = vunpack.c.h.b16 %v1741
        %v2145 = vunpack.c.l.b16 %v1742
        %v2146 = vunpack.c.h.b16 %v1742
        %v2147 = vunpack.c.l.b16 %v1743
        %v2148 = vunpack.c.h.b16 %v1743
        %v2149 = vunpack.c.l.b16 %v1744
        %v2150 = vunpack.c.h.b16 %v1744
        %v2151 = vpack.c.b16 %v1899, %v1895
        %v2152 = vpack.c.b16 %v1900, %v1896
        %v2153 = vpack.c.b16 %v1901, %v1897
        %v2154 = vpack.c.b16 %v1902, %v1898
        %v2155 = vpack.c.b16 %v1907, %v1903
        %v2156 = vpack.c.b16 %v1908, %v1904
        %v2157 = vpack.c.b16 %v1909, %v1905
        %v2158 = vpack.c.b16 %v1910, %v1906
        %v2159 = vpack.c.b16 %v1915, %v1911
        %v2160 = vpack.c.b16 %v1916, %v1912
        %v2161 = vpack.c.b16 %v1917, %v1913
        %v2162 = vpack.c.b16 %v1918, %v1914
        %v2163 = vpack.c.b16 %v1923, %v1919
        %v2164 = vpack.c.b16 %v1924, %v1920
        %v2165 = vpack.c.b16 %v1925, %v1921
        %v2166 = vpack.c.b16 %v1926, %v1922
        %v2167 = vpack.c.b16 %v1931, %v1927
        %v2168 = vpack.c.b16 %v1932, %v1928
        %v2169 = vpack.c.b16 %v1933, %v1929
        %v2170 = vpack.c.b16 %v1934, %v1930
        %v2171 = vpack.c.b16 %v1939, %v1935
        %v2172 = vpack.c.b16 %v1940, %v1936
        %v2173 = vpack.c.b16 %v1941, %v1937
        %v2174 = vpack.c.b16 %v1942, %v1938
        %v2175 = vpack.c.b16 %v1947, %v1943
        %v2176 = vpack.c.b16 %v1948, %v1944
        %v2177 = vpack.c.b16 %v1949, %v1945
        %v2178 = vpack.c.b16 %v1950, %v1946
        %v2179 = vpack.c.b16 %v1955, %v1951
        %v2180 = vpack.c.b16 %v1956, %v1952
        %v2181 = vpack.c.b16 %v1957, %v1953
        %v2182 = vpack.c.b16 %v1958, %v1954
        %v2183 = vpack.c.b16 %v1963, %v1959
        %v2184 = vpack.c.b16 %v1964, %v1960
        %v2185 = vpack.c.b16 %v1965, %v1961
        %v2186 = vpack.c.b16 %v1966, %v1962
        %v2187 = vpack.c.b16 %v1971, %v1967
        %v2188 = vpack.c.b16 %v1972, %v1968
        %v2189 = vpack.c.b16 %v1973, %v1969
        %v2190 = vpack.c.b16 %v1974, %v1970
        %v2191 = vpack.c.b16 %v1979, %v1975
        %v2192 = vpack.c.b16 %v1980, %v1976
        %v2193 = vpack.c.b16 %v1981, %v1977
        %v2194 = vpack.c.b16 %v1982, %v1978
        %v2195 = vpack.c.b16 %v1987, %v1983
        %v2196 = vpack.c.b16 %v1988, %v1984
        %v2197 = vpack.c.b16 %v1989, %v1985
        %v2198 = vpack.c.b16 %v1990, %v1986
        %v2199 = vpack.c.b16 %v1995, %v1991
        %v2200 = vpack.c.b16 %v1996, %v1992
        %v2201 = vpack.c.b16 %v1997, %v1993
        %v2202 = vpack.c.b16 %v1998, %v1994
        %v2203 = vpack.c.b16 %v2003, %v1999
        %v2204 = vpack.c.b16 %v2004, %v2000
        %v2205 = vpack.c.b16 %v2005, %v2001
        %v2206 = vpack.c.b16 %v2006, %v2002
        %v2207 = vpack.c.b16 %v2011, %v2007
        %v2208 = vpack.c.b16 %v2012, %v2008
        %v2209 = vpack.c.b16 %v2013, %v2009
        %v2210 = vpack.c.b16 %v2014, %v2010
        %v2211 = vpack.c.b16 %v2019, %v2015
        %v2212 = vpack.c.b16 %v2020, %v2016
        %v2213 = vpack.c.b16 %v2021, %v2017
        %v2214 = vpack.c.b16 %v2022, %v2018
        %v2215 = vpack.c.b16 %v2027, %v2023
        %v2216 = vpack.c.b16 %v2028, %v2024
        %v2217 = vpack.c.b16 %v2029, %v2025
        %v2218 = vpack.c.b16 %v2030, %v2026
        %v2219 = vpack.c.b16 %v2035, %v2031
        %v2220 = vpack.c.b16 %v2036, %v2032
        %v2221 = vpack.c.b16 %v2037, %v2033
        %v2222 = vpack.c.b16 %v2038, %v2034
        %v2223 = vpack.c.b16 %v2043, %v2039
        %v2224 = vpack.c.b16 %v2044, %v2040
        %v2225 = vpack.c.b16 %v2045, %v2041
        %v2226 = vpack.c.b16 %v2046, %v2042
        %v2227 = vpack.c.b16 %v2051, %v2047
        %v2228 = vpack.c.b16 %v2052, %v2048
        %v2229 = vpack.c.b16 %v2053, %v2049
        %v2230 = vpack.c.b16 %v2054, %v2050
        %v2231 = vpack.c.b16 %v2059, %v2055
        %v2232 = vpack.c.b16 %v2060, %v2056
        %v2233 = vpack.c.b16 %v2061, %v2057
        %v2234 = vpack.c.b16 %v2062, %v2058
        %v2235 = vpack.c.b16 %v2067, %v2063
        %v2236 = vpack.c.b16 %v2068, %v2064
        %v2237 = vpack.c.b16 %v2069, %v2065
        %v2238 = vpack.c.b16 %v2070, %v2066
        %v2239 = vpack.c.b16 %v2075, %v2071
        %v2240 = vpack.c.b16 %v2076, %v2072
        %v2241 = vpack.c.b16 %v2077, %v2073
        %v2242 = vpack.c.b16 %v2078, %v2074
        %v2243 = vpack.c.b16 %v2083, %v2079
        %v2244 = vpack.c.b16 %v2084, %v2080
        %v2245 = vpack.c.b16 %v2085, %v2081
        %v2246 = vpack.c.b16 %v2086, %v2082
        %v2247 = vpack.c.b16 %v2091, %v2087
        %v2248 = vpack.c.b16 %v2092, %v2088
        %v2249 = vpack.c.b16 %v2093, %v2089
        %v2250 = vpack.c.b16 %v2094, %v2090
        %v2251 = vpack.c.b16 %v2099, %v2095
        %v2252 = vpack.c.b16 %v2100, %v2096
        %v2253 = vpack.c.b16 %v2101, %v2097
        %v2254 = vpack.c.b16 %v2102, %v2098
        %v2255 = vpack.c.b16 %v2107, %v2103
        %v2256 = vpack.c.b16 %v2108, %v2104
        %v2257 = vpack.c.b16 %v2109, %v2105
        %v2258 = vpack.c.b16 %v2110, %v2106
        %v2259 = vpack.c.b16 %v2115, %v2111
        %v2260 = vpack.c.b16 %v2116, %v2112
        %v2261 = vpack.c.b16 %v2117, %v2113
        %v2262 = vpack.c.b16 %v2118, %v2114
        %v2263 = vpack.c.b16 %v2123, %v2119
        %v2264 = vpack.c.b16 %v2124, %v2120
        %v2265 = vpack.c.b16 %v2125, %v2121
        %v2266 = vpack.c.b16 %v2126, %v2122
        %v2267 = vpack.c.b16 %v2131, %v2127
        %v2268 = vpack.c.b16 %v2132, %v2128
        %v2269 = vpack.c.b16 %v2133, %v2129
        %v2270 = vpack.c.b16 %v2134, %v2130
        %v2271 = vpack.c.b16 %v2139, %v2135
        %v2272 = vpack.c.b16 %v2140, %v2136
        %v2273 = vpack.c.b16 %v2141, %v2137
        %v2274 = vpack.c.b16 %v2142, %v2138
        %v2275 = vpack.c.b16 %v2147, %v2143
        %v2276 = vpack.c.b16 %v2148, %v2144
        %v2277 = vpack.c.b16 %v2149, %v2145
        %v2278 = vpack.c.b16 %v2150, %v2146
        %2407 = vmatprep.subr.bf16.mxu0 %v2152
        %2408 = vmatpush1.bf16.msra.mxu0 %v2151
        %2409 = vmatprep.subr.bf16.mxu0 %v2156
        %2410 = vmatpush1.bf16.msra.mxu0 %v2155
        %2411 = vmatprep.subr.bf16.mxu0 %v2160
        %2412 = vmatpush1.bf16.msra.mxu0 %v2159
        %2413 = vmatprep.subr.bf16.mxu0 %v2164
        %2414 = vmatpush1.bf16.msra.mxu0 %v2163
        %2415 = vmatprep.subr.bf16.mxu0 %v2168
        %2416 = vmatpush1.bf16.msra.mxu0 %v2167
        %2417 = vmatprep.subr.bf16.mxu0 %v2172
        %2418 = vmatpush1.bf16.msra.mxu0 %v2171
        %2419 = vmatprep.subr.bf16.mxu0 %v2176
        %2420 = vmatpush1.bf16.msra.mxu0 %v2175
        %2421 = vmatprep.subr.bf16.mxu0 %v2180
        %2422 = vmatpush1.bf16.msra.mxu0 %v2179
        %2423 = vmatprep.subr.bf16.mxu0 %v2184
        %2424 = vmatpush1.bf16.msra.mxu0 %v2183
        %2425 = vmatprep.subr.bf16.mxu0 %v2188
        %2426 = vmatpush1.bf16.msra.mxu0 %v2187
        %2427 = vmatprep.subr.bf16.mxu0 %v2192
        %2428 = vmatpush1.bf16.msra.mxu0 %v2191
        %2429 = vmatprep.subr.bf16.mxu0 %v2196
        %2430 = vmatpush1.bf16.msra.mxu0 %v2195
        %2431 = vmatprep.subr.bf16.mxu0 %v2200
        %2432 = vmatpush1.bf16.msra.mxu0 %v2199
        %2433 = vmatprep.subr.bf16.mxu0 %v2204
        %2434 = vmatpush1.bf16.msra.mxu0 %v2203
        %2435 = vmatprep.subr.bf16.mxu0 %v2208
        %2436 = vmatpush1.bf16.msra.mxu0 %v2207
        %2437 = vmatprep.subr.bf16.mxu0 %v2212
        %2438 = vmatpush1.bf16.msra.mxu0 %v2211
        %2439 = vmatprep.mubr.bf16.mxu0 %v1610
        %2440 = vmatmul.mubr.bf16.gmra.mrb[0].mxu0 %v1609
        %v2441 = vpop.f32.mrb[0].mxu0
        %v2442 = vadd.f32 %v1750, %v2441
        %v2443 = vpop.f32.mrb[0].mxu0
        %v2444 = vadd.f32 %v1754, %v2443
        %v2445 = vpop.f32.mrb[0].mxu0
        %v2446 = vadd.f32 %v1750, %v2445
        %v2447 = vpop.f32.mrb[0].mxu0
        %v2448 = vadd.f32 %v1754, %v2447
        %2449 = vmatprep.mubr.bf16.mxu0 %v1614
        %2450 = vmatmul.mubr.bf16.gmra.mrb[0].mxu0 %v1613
        %v2451 = vpop.f32.mrb[0].mxu0
        %v2452 = vadd.f32 %v1750, %v2451
        %v2453 = vpop.f32.mrb[0].mxu0
        %v2454 = vadd.f32 %v1754, %v2453
        %v2455 = vpop.f32.mrb[0].mxu0
        %v2456 = vadd.f32 %v1750, %v2455
        %v2457 = vpop.f32.mrb[0].mxu0
        %v2458 = vadd.f32 %v1754, %v2457
        %2459 = vdwg.mxu0
        %2460 = vmatprep.subr.bf16.mxu0 %v2216
        %2461 = vmatpush1.bf16.msra.mxu0 %v2215
        %2462 = vmatprep.subr.bf16.mxu0 %v2220
        %2463 = vmatpush1.bf16.msra.mxu0 %v2219
        %2464 = vmatprep.subr.bf16.mxu0 %v2224
        %2465 = vmatpush1.bf16.msra.mxu0 %v2223
        %2466 = vmatprep.subr.bf16.mxu0 %v2228
        %2467 = vmatpush1.bf16.msra.mxu0 %v2227
        %2468 = vmatprep.subr.bf16.mxu0 %v2232
        %2469 = vmatpush1.bf16.msra.mxu0 %v2231
        %2470 = vmatprep.subr.bf16.mxu0 %v2236
        %2471 = vmatpush1.bf16.msra.mxu0 %v2235
        %2472 = vmatprep.subr.bf16.mxu0 %v2240
        %2473 = vmatpush1.bf16.msra.mxu0 %v2239
        %2474 = vmatprep.subr.bf16.mxu0 %v2244
        %2475 = vmatpush1.bf16.msra.mxu0 %v2243
        %2476 = vmatprep.subr.bf16.mxu0 %v2248
        %2477 = vmatpush1.bf16.msra.mxu0 %v2247
        %2478 = vmatprep.subr.bf16.mxu0 %v2252
        %2479 = vmatpush1.bf16.msra.mxu0 %v2251
        %2480 = vmatprep.subr.bf16.mxu0 %v2256
        %2481 = vmatpush1.bf16.msra.mxu0 %v2255
        %2482 = vmatprep.subr.bf16.mxu0 %v2260
        %2483 = vmatpush1.bf16.msra.mxu0 %v2259
        %2484 = vmatprep.subr.bf16.mxu0 %v2264
        %2485 = vmatpush1.bf16.msra.mxu0 %v2263
        %2486 = vmatprep.subr.bf16.mxu0 %v2268
        %2487 = vmatpush1.bf16.msra.mxu0 %v2267
        %2488 = vmatprep.subr.bf16.mxu0 %v2272
        %2489 = vmatpush1.bf16.msra.mxu0 %v2271
        %2490 = vmatprep.subr.bf16.mxu0 %v2276
        %2491 = vmatpush1.bf16.msra.mxu0 %v2275
        %2492 = vmatprep.mubr.bf16.mxu0 %v1612
        %2493 = vmatmul.mubr.bf16.gmra.mrb[0].mxu0 %v1611
        %v2494 = vpop.f32.mrb[0].mxu0
        %v2495 = vadd.f32 %v2442, %v2494
        %v2496 = vpop.f32.mrb[0].mxu0
        %v2497 = vadd.f32 %v2444, %v2496
        %v2498 = vpop.f32.mrb[0].mxu0
        %v2499 = vadd.f32 %v2446, %v2498
        %v2500 = vpop.f32.mrb[0].mxu0
        %v2501 = vadd.f32 %v2448, %v2500
        %2502 = vmatprep.mubr.bf16.mxu0 %v1616
        %2503 = vmatmul.mubr.bf16.gmra.mrb[0].mxu0 %v1615
        %v2504 = vpop.f32.mrb[0].mxu0
        %v2505 = vadd.f32 %v2452, %v2504
        %v2506 = vpop.f32.mrb[0].mxu0
        %v2507 = vadd.f32 %v2454, %v2506
        %v2508 = vpop.f32.mrb[0].mxu0
        %v2509 = vadd.f32 %v2456, %v2508
        %v2510 = vpop.f32.mrb[0].mxu0
        %v2511 = vadd.f32 %v2458, %v2510
        %2512 = vdwg.mxu0
        %2513 = vmatprep.subr.bf16.mxu0 %v2154
        %2514 = vmatpush1.bf16.msra.mxu0 %v2153
        %2515 = vmatprep.subr.bf16.mxu0 %v2158
        %2516 = vmatpush1.bf16.msra.mxu0 %v2157
        %2517 = vmatprep.subr.bf16.mxu0 %v2162
        %2518 = vmatpush1.bf16.msra.mxu0 %v2161
        %2519 = vmatprep.subr.bf16.mxu0 %v2166
        %2520 = vmatpush1.bf16.msra.mxu0 %v2165
        %2521 = vmatprep.subr.bf16.mxu0 %v2170
        %2522 = vmatpush1.bf16.msra.mxu0 %v2169
        %2523 = vmatprep.subr.bf16.mxu0 %v2174
        %2524 = vmatpush1.bf16.msra.mxu0 %v2173
        %2525 = vmatprep.subr.bf16.mxu0 %v2178
        %2526 = vmatpush1.bf16.msra.mxu0 %v2177
        %2527 = vmatprep.subr.bf16.mxu0 %v2182
        %2528 = vmatpush1.bf16.msra.mxu0 %v2181
        %2529 = vmatprep.subr.bf16.mxu0 %v2186
        %2530 = vmatpush1.bf16.msra.mxu0 %v2185
        %2531 = vmatprep.subr.bf16.mxu0 %v2190
        %2532 = vmatpush1.bf16.msra.mxu0 %v2189
        %2533 = vmatprep.subr.bf16.mxu0 %v2194
        %2534 = vmatpush1.bf16.msra.mxu0 %v2193
        %2535 = vmatprep.subr.bf16.mxu0 %v2198
        %2536 = vmatpush1.bf16.msra.mxu0 %v2197
        %2537 = vmatprep.subr.bf16.mxu0 %v2202
        %2538 = vmatpush1.bf16.msra.mxu0 %v2201
        %2539 = vmatprep.subr.bf16.mxu0 %v2206
        %2540 = vmatpush1.bf16.msra.mxu0 %v2205
        %2541 = vmatprep.subr.bf16.mxu0 %v2210
        %2542 = vmatpush1.bf16.msra.mxu0 %v2209
        %2543 = vmatprep.subr.bf16.mxu0 %v2214
        %2544 = vmatpush1.bf16.msra.mxu0 %v2213
        %2545 = vmatprep.mubr.bf16.mxu0 %v1610
        %2546 = vmatmul.mubr.bf16.gmra.mrb[0].mxu0 %v1609
        %v2547 = vpop.f32.mrb[0].mxu0
        %v2548 = vadd.f32 %v1758, %v2547
        %v2549 = vpop.f32.mrb[0].mxu0
        %v2550 = vadd.f32 %v1762, %v2549
        %v2551 = vpop.f32.mrb[0].mxu0
        %v2552 = vadd.f32 %v1758, %v2551
        %v2553 = vpop.f32.mrb[0].mxu0
        %v2554 = vadd.f32 %v1762, %v2553
        %2555 = vmatprep.mubr.bf16.mxu0 %v1614
        %2556 = vmatmul.mubr.bf16.gmra.mrb[0].mxu0 %v1613
        %v2557 = vpop.f32.mrb[0].mxu0
        %v2558 = vadd.f32 %v1758, %v2557
        %v2559 = vpop.f32.mrb[0].mxu0
        %v2560 = vadd.f32 %v1762, %v2559
        %v2561 = vpop.f32.mrb[0].mxu0
        %v2562 = vadd.f32 %v1758, %v2561
        %v2563 = vpop.f32.mrb[0].mxu0
        %v2564 = vadd.f32 %v1762, %v2563
        %2565 = vdwg.mxu0
        %2566 = vmatprep.subr.bf16.mxu0 %v2218
        %2567 = vmatpush1.bf16.msra.mxu0 %v2217
        %2568 = vmatprep.subr.bf16.mxu0 %v2222
        %2569 = vmatpush1.bf16.msra.mxu0 %v2221
        %2570 = vmatprep.subr.bf16.mxu0 %v2226
        %2571 = vmatpush1.bf16.msra.mxu0 %v2225
        %2572 = vmatprep.subr.bf16.mxu0 %v2230
        %2573 = vmatpush1.bf16.msra.mxu0 %v2229
        %2574 = vmatprep.subr.bf16.mxu0 %v2234
        %2575 = vmatpush1.bf16.msra.mxu0 %v2233
        %2576 = vmatprep.subr.bf16.mxu0 %v2238
        %2577 = vmatpush1.bf16.msra.mxu0 %v2237
        %2578 = vmatprep.subr.bf16.mxu0 %v2242
        %2579 = vmatpush1.bf16.msra.mxu0 %v2241
        %2580 = vmatprep.subr.bf16.mxu0 %v2246
        %2581 = vmatpush1.bf16.msra.mxu0 %v2245
        %2582 = vmatprep.subr.bf16.mxu0 %v2250
        %2583 = vmatpush1.bf16.msra.mxu0 %v2249
        %2584 = vmatprep.subr.bf16.mxu0 %v2254
        %2585 = vmatpush1.bf16.msra.mxu0 %v2253
        %2586 = vmatprep.subr.bf16.mxu0 %v2258
        %2587 = vmatpush1.bf16.msra.mxu0 %v2257
        %2588 = vmatprep.subr.bf16.mxu0 %v2262
        %2589 = vmatpush1.bf16.msra.mxu0 %v2261
        %2590 = vmatprep.subr.bf16.mxu0 %v2266
        %2591 = vmatpush1.bf16.msra.mxu0 %v2265
        %2592 = vmatprep.subr.bf16.mxu0 %v2270
        %2593 = vmatpush1.bf16.msra.mxu0 %v2269
        %2594 = vmatprep.subr.bf16.mxu0 %v2274
        %2595 = vmatpush1.bf16.msra.mxu0 %v2273
        %2596 = vmatprep.subr.bf16.mxu0 %v2278
        %2597 = vmatpush1.bf16.msra.mxu0 %v2277
        %2598 = vmatprep.mubr.bf16.mxu0 %v1612
        %2599 = vmatmul.mubr.bf16.gmra.mrb[0].mxu0 %v1611
        %v2600 = vpop.f32.mrb[0].mxu0
        %v2601 = vadd.f32 %v2548, %v2600
        %v2602 = vpop.f32.mrb[0].mxu0
        %v2603 = vadd.f32 %v2550, %v2602
        %v2604 = vpop.f32.mrb[0].mxu0
        %v2605 = vadd.f32 %v2552, %v2604
        %v2606 = vpop.f32.mrb[0].mxu0
        %v2607 = vadd.f32 %v2554, %v2606
        %2608 = vmatprep.mubr.bf16.mxu0 %v1616
        %2609 = vmatmul.mubr.bf16.gmra.mrb[0].mxu0 %v1615
        %v2610 = vpop.f32.mrb[0].mxu0
        %v2611 = vadd.f32 %v2558, %v2610
        %v2612 = vpop.f32.mrb[0].mxu0
        %v2613 = vadd.f32 %v2560, %v2612
        %v2614 = vpop.f32.mrb[0].mxu0
        %v2615 = vadd.f32 %v2562, %v2614
        %v2616 = vpop.f32.mrb[0].mxu0
        %v2617 = vadd.f32 %v2564, %v2616
        %2618 = vdwg.mxu0
        %v2619 = vmax.f32 %v2495, 0.0
        %v2620 = vmax.f32 %v2497, 0.0
        %v2621 = vmax.f32 %v2601, 0.0
        %v2622 = vmax.f32 %v2603, 0.0
        %v2623 = vmax.f32 %v2499, 0.0
        %v2624 = vmax.f32 %v2501, 0.0
        %v2625 = vmax.f32 %v2605, 0.0
        %v2626 = vmax.f32 %v2607, 0.0
        %v2627 = vmax.f32 %v2505, 0.0
        %v2628 = vmax.f32 %v2507, 0.0
        %v2629 = vmax.f32 %v2611, 0.0
        %v2630 = vmax.f32 %v2613, 0.0
        %v2631 = vmax.f32 %v2509, 0.0
        %v2632 = vmax.f32 %v2511, 0.0
        %v2633 = vmax.f32 %v2615, 0.0
        %v2634 = vmax.f32 %v2617, 0.0
        %v2635 = vld [vmem:[%s7] sm:$0xf]
        %v2637 = vlaneseq
        %v2638 = vshrl.u32 %v2637, 7
        %v2639 = vsub.s32 0, %v2638
        %v2640 = vrot.slane %v2635, %v2639
        %v2641 = vlaneseq
        %v2642 = vshrl.u32 %v2641, 7
        %v2643 = vsub.s32 1, %v2642
        %v2644 = vrot.slane %v2635, %v2643
        %v2645 = vlaneseq
        %v2646 = vshrl.u32 %v2645, 7
        %v2647 = vsub.s32 2, %v2646
        %v2648 = vrot.slane %v2635, %v2647
        %v2649 = vlaneseq
        %v2650 = vshrl.u32 %v2649, 7
        %v2651 = vsub.s32 3, %v2650
        %v2652 = vrot.slane %v2635, %v2651
        %v2657 = vmul.f32 %v2619, %v2640
        %v2658 = vmul.f32 %v2620, %v2644
        %v2659 = vmul.f32 %v2621, %v2648
        %v2660 = vmul.f32 %v2622, %v2652
        %v2661 = vmul.f32 %v2623, %v2640
        %v2662 = vmul.f32 %v2624, %v2644
        %v2663 = vmul.f32 %v2625, %v2648
        %v2664 = vmul.f32 %v2626, %v2652
        %v2665 = vmul.f32 %v2627, %v2640
        %v2666 = vmul.f32 %v2628, %v2644
        %v2667 = vmul.f32 %v2629, %v2648
        %v2668 = vmul.f32 %v2630, %v2652
        %v2669 = vmul.f32 %v2631, %v2640
        %v2670 = vmul.f32 %v2632, %v2644
        %v2671 = vmul.f32 %v2633, %v2648
        %v2672 = vmul.f32 %v2634, %v2652
        %v2673 = vadd.f32 %v2657, %v2658
        %v2674 = vadd.f32 %v2673, %v2659
        %v2675 = vadd.f32 %v2674, %v2660
        %2676 = vadd.xlane.f32.xlu0 %v2675
        %v2677 = vpop.xlane.xlu0 %2676
        %v2678 = vadd.f32 %v2661, %v2662
        %v2679 = vadd.f32 %v2678, %v2663
        %v2680 = vadd.f32 %v2679, %v2664
        %2681 = vadd.xlane.f32.xlu0 %v2680
        %v2682 = vpop.xlane.xlu0 %2681
        %v2683 = vadd.f32 %v2665, %v2666
        %v2684 = vadd.f32 %v2683, %v2667
        %v2685 = vadd.f32 %v2684, %v2668
        %2686 = vadd.xlane.f32.xlu0 %v2685
        %v2687 = vpop.xlane.xlu0 %2686
        %v2688 = vadd.f32 %v2669, %v2670
        %v2689 = vadd.f32 %v2688, %v2671
        %v2690 = vadd.f32 %v2689, %v2672
        %2691 = vadd.xlane.f32.xlu0 %v2690
        %v2692 = vpop.xlane.xlu0 %2691
        %s2693 = sld [smem:[#allocation2]]
        %v2694 = vstv %s2693
        %v2695 = vadd.f32 %v2677, %v2694
        %v2696 = vadd.f32 %v2682, %v2694
        %v2697 = vadd.f32 %v2687, %v2694
        %v2698 = vadd.f32 %v2692, %v2694
        %vm2699 = vcmask 7168
        %2700 = vst.msk [vmem:[%s365] sm:$0xff] %vm2699, %v2695
        %2701 = vst.msk [vmem:[%s365 + $0x8] sm:$0xff] %vm2699, %v2696
        %2702 = vst.msk [vmem:[%s365 + $0x10] sm:$0xff] %vm2699, %v2697
        %2703 = vst.msk [vmem:[%s365 + $0x18] sm:$0xff] %vm2699, %v2698
        %s2704 = smul.u32 4, %s23
        %p2705 = scmp.lt.s32.totalorder %s2704, 7
        %s2706 = scalar_select %p2705, %s2704, 7
        %s2707 = smul.addr %s2706, 8
        %s2708 = scalar_lea.vmem %s9, %s2707
        // Predicated region
        $region65: #{tpu_custom_call.1} parent=55 // pred_check
          %p2709 = pneg %p235
        $region66: #{tpu_custom_call.1} parent=55 // pred_check_branch
          %2711 = sbr.rel (%p2709) target = $region68
        $region67: #{tpu_custom_call.1} parent=55 // pred_region
          %s2712 = smul.u32 4, %s23
        $region68: #{tpu_custom_call.1} parent=55 // pred_fallthru
          _
      $region56: #{tpu_custom_call.1} parent=5 // pred_fallthru
        _
      %p2713 = scmp.le.s32.totalorder 2, %s18
      // Predicated region
      $region69: #{tpu_custom_call.1} parent=5 // pred_check
        %p2714 = pneg %p2713
      $region70: #{tpu_custom_call.1} parent=5 // pred_check_branch
        %2716 = sbr.rel (%p2714) target = $region72
      $region71: #{tpu_custom_call.1} parent=5 // pred_region
        %s2717 = ssub.s32 %s18, 2
        // Predicated region
        $region73: #{tpu_custom_call.1} parent=71 // pred_check
          %p2718 = pneg %p241
        $region74: #{tpu_custom_call.1} parent=71 // pred_check_branch
          %2720 = sbr.rel (%p2718) target = $region76
        $region75: #{tpu_custom_call.1} parent=71 // pred_region
          %s2721 = smul.u32 4, %s24
          %p2722 = scmp.lt.s32.totalorder %s2721, 7
          %s2723 = scalar_select %p2722, %s2721, 7
          %s2724 = smul.addr %s2723, 8
          %s2725 = scalar_lea.vmem %s9, %s2724
        $region76: #{tpu_custom_call.1} parent=71 // pred_fallthru
          _
      $region72: #{tpu_custom_call.1} parent=5 // pred_fallthru
        _
    $region6: #{tpu_custom_call.1} parent=1 // loop_footer
      %s22 = sadd.s32 1, %s18
    $region7: #{tpu_custom_call.1} parent=1 // loop_footer_branch
      %17 = sbr.rel target = $region3
    $region8: #{tpu_custom_call.1} parent=1 // loop_exit
      _
    %2726 = vsyncpa [#allocation4], 1
    %s2727 = scalar_lea.sflag [#allocation4], 1
    %2728 = vsyncpa %s2727, 1
    %2729 = vsyncpa [#allocation6], 1

</llo_original>
